<compile_context>
chip_gen: v6e
topology: v6e:2x2x1
jax: 0.10.0
libtpu: 0.0.40
codegen_flags: <defaults>
</compile_context>

<pallas_src>
import functools

import jax
import jax.numpy as jnp
from jax.experimental import pallas as pl
from jax.experimental.pallas import tpu as pltpu


def _round_up(x, m):
    return ((x + m - 1) // m) * m


def _chip_flags():
    kind = ""
    try:
        kind = jax.devices()[0].device_kind.lower()
    except Exception:
        pass
    return ("v5" in kind), ("v7" in kind)


def _vmem_capacity_bytes():
    try:
        cap = int(pltpu.get_tpu_info().vmem_capacity_bytes)
        if cap > 0:
            return cap
    except Exception:
        pass
    _, is_v7 = _chip_flags()
    return (64 << 20) if is_v7 else (128 << 20)


def _semantic_attention_kernel(z_ref, w1_ref, b1_ref, w2_ref, o_ref, *,
                               bf16_tanh, approx_recip):
    # z_ref: (TN, M, D) node tile in the compute dtype; weights are full blocks.
    z = z_ref[...]
    tn, m, d = z.shape

    # --- first linear on the MXU.  With bf16_tanh the MXU emits bf16 directly
    #     (no f32 round-trip before the tanh); otherwise accumulate/emit f32. ---
    acc_dtype = jnp.bfloat16 if bf16_tanh else jnp.float32
    h = jnp.dot(z.reshape(tn * m, d), w1_ref[...],
                preferred_element_type=acc_dtype)           # (TN*M, H)
    h = jnp.tanh(h + b1_ref[...])                           # EUP tanh

    # --- second linear (H -> 1, no bias): VPU multiply + lane (XLU) reduce.
    #     (TN*M, H) -> (TN, M, H) is a free leading-dim regrouping; multiplying
    #     by the f32 w2 row promotes the product so the H-reduction is f32. ---
    h3 = h.reshape(tn, m, -1)                                # (TN, M, H)
    w = jnp.sum(h3 * w2_ref[...][None], axis=-1, keepdims=True)   # (TN, M, 1) f32

    # --- softmax over the M views (dim=1 in PyTorch), deferred normalization.
    #     Stats and accumulation stay in f32; the divide is one EUP reciprocal
    #     applied to the lane-dense (TN, D) accumulator. ---
    w_max = jnp.max(w, axis=1, keepdims=True)                # (TN, 1, 1)
    e = jnp.exp(w - w_max)                                   # (TN, M, 1) f32
    num = jnp.sum(e * z, axis=1)                             # (TN, D), f32 accumulate
    den = jnp.sum(e, axis=1)                                 # (TN, 1)
    out = num * pl.reciprocal(den, approx=approx_recip)      # lane-dense (TN, D)
    o_ref[...] = out.astype(o_ref.dtype)


def semantic_attention(z, w1, b1, w2, *, tile_n=2048, compute_dtype=None,
                       bf16_tanh=None):
    """z: (N, M, D); w1: (D, H); b1: (H,); w2: (H, 1) -> out (N, D)."""
    N, M, D = z.shape
    H = w1.shape[1]
    assert w1.shape == (D, H) and b1.shape == (H,) and w2.shape == (H, 1)

    out_dtype = z.dtype
    is_v5, is_v7 = _chip_flags()

    # bf16 MXU operands on every generation (halves the z HBM stream); the
    # caller-visible output dtype stays equal to the input dtype.
    if compute_dtype is None:
        compute_dtype = jnp.bfloat16 if z.dtype == jnp.float32 else z.dtype
    compute_dtype = jnp.dtype(compute_dtype)
    if bf16_tanh is None:
        bf16_tanh = not is_v5                       # bf16 EUP only on v6e/v7x
    bf16_tanh = bool(bf16_tanh) and compute_dtype == jnp.bfloat16
    # Exact division on the full-precision path; approx EUP reciprocal otherwise.
    approx_recip = compute_dtype == jnp.bfloat16

    # Lane-dense output guard: pad D to a multiple of 128 (avoids masked vst).
    D_pad = _round_up(D, 128)
    if D_pad != D:
        z = jnp.pad(z, ((0, 0), (0, 0), (0, D_pad - D)))
        w1 = jnp.pad(w1, ((0, D_pad - D), (0, 0)))

    # Generation-aware VMEM limit and tile budget (128 MiB parts vs v7x 64 MiB).
    vmem_cap = _vmem_capacity_bytes()
    vmem_limit = max(32 << 20, min(vmem_cap - (16 << 20), 100 << 20))
    vmem_budget = vmem_limit // 2

    z_itm = compute_dtype.itemsize
    h_itm = 2 if bf16_tanh else 4
    out_itm = jnp.dtype(out_dtype).itemsize
    per_node = (2 * M * D_pad * z_itm          # double-buffered z block
                + 2 * D_pad * out_itm          # double-buffered out block
                + M * H * h_itm                # h intermediate
                + 2 * M * D_pad * 4)           # f32 temporaries (exp(w)*z path)
    fit = max(8, int(vmem_budget // per_node) // 8 * 8)
    tn = max(8, min(int(tile_n), fit) // 8 * 8)
    # Keep enough grid steps: >= 8 so both v7x TensorCores get work, >= 2
    # elsewhere so the DMA pipeline overlaps compute.
    min_steps = 8 if is_v7 else 2
    tn = min(tn, max(8, _round_up(pl.cdiv(N, min_steps), 8)))
    tn = min(tn, _round_up(N, 8))

    # Pad N so the 1-D grid covers it; padded rows (z == 0) yield zero output.
    n_pad = _round_up(N, tn)
    if n_pad != N:
        z = jnp.pad(z, ((0, n_pad - N), (0, 0), (0, 0)))

    z_in = z.astype(compute_dtype)
    w1_in = w1.astype(compute_dtype)
    b1_in = b1.astype(jnp.bfloat16 if bf16_tanh else jnp.float32).reshape(1, H)
    w2_in = w2.astype(jnp.float32).reshape(1, H)

    kernel = functools.partial(_semantic_attention_kernel,
                               bf16_tanh=bf16_tanh, approx_recip=approx_recip)

    def run(buffered_weights):
        # Grid-invariant weights can be single-buffered (saves VMEM + DMA
        # descriptors); fall back to default double-buffering if unsupported.
        wmode = dict(pipeline_mode=pl.Buffered(1)) if buffered_weights else {}
        return pl.pallas_call(
            kernel,
            out_shape=jax.ShapeDtypeStruct((n_pad, D_pad), out_dtype),
            grid_spec=pltpu.PrefetchScalarGridSpec(
                num_scalar_prefetch=0,
                grid=(n_pad // tn,),
                in_specs=[
                    pl.BlockSpec((tn, M, D_pad), lambda i: (i, 0, 0)),      # z tile
                    pl.BlockSpec((D_pad, H), lambda i: (0, 0), **wmode),    # w1
                    pl.BlockSpec((1, H), lambda i: (0, 0), **wmode),        # b1
                    pl.BlockSpec((1, H), lambda i: (0, 0), **wmode),        # w2 row
                ],
                out_specs=pl.BlockSpec((tn, D_pad), lambda i: (i, 0)),
            ),
            compiler_params=pltpu.CompilerParams(
                dimension_semantics=("parallel",),   # node tiles shard across TCs
                vmem_limit_bytes=int(vmem_limit),
            ),
        )(z_in, w1_in, b1_in, w2_in)

    try:
        out = run(True)
    except Exception:
        out = run(False)
    return out[:N, :D]


def semantic_attention_ref(z, w1, b1, w2):
    # Pure-JAX reference matching the PyTorch forward.
    w = jnp.tanh(jnp.einsum("nmd,dh->nmh", z, w1) + b1) @ w2     # (N, M, 1)
    beta = jax.nn.softmax(w, axis=1)
    return jnp.sum(beta * z, axis=1)


if __name__ == "__main__":
    # Shapes consistent with AttentionNet: the semantic-attention input size is
    # out_size * num_heads (= 32 * 4 = 128, lane-dense), M = num_meta_paths = 8,
    # projection hidden H = 128 (module default).
    M, D, H = 8, 128, 128

    key = jax.random.PRNGKey(0)
    kz1, kz2, kw1, kb1, kw2 = jax.random.split(key, 5)

    bound1 = 1.0 / (D ** 0.5)
    w1 = jax.random.uniform(kw1, (D, H), jnp.float32, -bound1, bound1)
    b1 = jax.random.uniform(kb1, (H,), jnp.float32, -bound1, bound1)
    bound2 = 1.0 / (H ** 0.5)
    w2 = jax.random.uniform(kw2, (H, 1), jnp.float32, -bound2, bound2)

    # Case 1: full-precision path (compute f32, exact reciprocal) with N not a
    # multiple of the tile -> exercises the padding / tail path, tight tolerance.
    N1 = 20
    z1 = jax.random.normal(kz1, (N1, M, D), dtype=jnp.float32)
    out1 = jax.block_until_ready(
        semantic_attention(z1, w1, b1, w2, compute_dtype=jnp.float32,
                           bf16_tanh=False))
    ref1 = semantic_attention_ref(z1, w1, b1, w2)
    assert out1.shape == (N1, D) and out1.dtype == z1.dtype
    assert jnp.allclose(out1, ref1, atol=3e-5, rtol=3e-5), "case1 mismatch vs reference"

    # Case 2: default production path (bf16 operands / bf16 tanh where the chip
    # supports it) with a multi-step grid; tolerance reflects bf16 operand noise.
    N2 = 200
    z2 = jax.random.normal(kz2, (N2, M, D), dtype=jnp.float32)
    out2 = jax.block_until_ready(semantic_attention(z2, w1, b1, w2))
    ref2 = semantic_attention_ref(z2, w1, b1, w2)
    assert out2.shape == (N2, D) and out2.dtype == z2.dtype
    err2 = jnp.abs(out2 - ref2)
    assert float(jnp.mean(err2)) < 2e-2, "case2 mean error too large"
    assert jnp.allclose(out2, ref2, atol=1e-1, rtol=1e-1), "case2 mismatch vs reference"

    print("KERNEL_OK")
</pallas_src>

<mosaic_0001>
module attributes {stable_mosaic.version = 11 : i64} {
  func.func @_semantic_attention_kernel(%arg0: i32, %arg1: memref<16x8x128xf32, #tpu.memory_space<vmem>>, %arg2: memref<128x128xf32, #tpu.memory_space<vmem>>, %arg3: memref<1x128xf32, #tpu.memory_space<vmem>>, %arg4: memref<1x128xf32, #tpu.memory_space<vmem>>, %arg5: memref<16x128xf32, #tpu.memory_space<vmem>>) attributes {dimension_semantics = [#tpu.dimension_semantics<parallel>], iteration_bounds = array<i64: 2>, scalar_prefetch = 0 : i64, scratch_operands = 0 : i64, tpu.core_type = #tpu.core_type<tc>, window_params = [{transform_indices = @transform_0, window_bounds = array<i64: 16, 8, 128>}, {pipeline_mode = #tpu.pipeline_mode<synchronous>, transform_indices = @transform_1, window_bounds = array<i64: 128, 128>}, {pipeline_mode = #tpu.pipeline_mode<synchronous>, transform_indices = @transform_2, window_bounds = array<i64: 1, 128>}, {pipeline_mode = #tpu.pipeline_mode<synchronous>, transform_indices = @transform_3, window_bounds = array<i64: 1, 128>}, {transform_indices = @transform_4, window_bounds = array<i64: 16, 128>}]} {
    %c0 = arith.constant 0 : index
    %c0_0 = arith.constant 0 : index
    %c0_1 = arith.constant 0 : index
    %0 = vector.load %arg1[%c0, %c0_0, %c0_1] : memref<16x8x128xf32, #tpu.memory_space<vmem>>, vector<16x8x128xf32>
    %1 = vector.shape_cast %0 : vector<16x8x128xf32> to vector<128x128xf32>
    %c0_2 = arith.constant 0 : index
    %c0_3 = arith.constant 0 : index
    %2 = vector.load %arg2[%c0_2, %c0_3] : memref<128x128xf32, #tpu.memory_space<vmem>>, vector<128x128xf32>
    %cst = arith.constant dense<0.000000e+00> : vector<128x128xf32>
    %3 = tpu.matmul %1, %2, %cst {dimension_numbers = #tpu.dot_dimension_numbers<[1], [0], [0], [1], [0, 0, 1, 1], [], []>} : vector<128x128xf32>, vector<128x128xf32>, vector<128x128xf32> -> vector<128x128xf32>
    %c0_4 = arith.constant 0 : index
    %c0_5 = arith.constant 0 : index
    %4 = vector.load %arg3[%c0_4, %c0_5] : memref<1x128xf32, #tpu.memory_space<vmem>>, vector<1x128xf32>
    %5 = vector.broadcast %4 : vector<1x128xf32> to vector<128x128xf32>
    %6 = arith.addf %3, %5 : vector<128x128xf32>
    %7 = math.tanh %6 : vector<128x128xf32>
    %8 = vector.shape_cast %7 : vector<128x128xf32> to vector<16x8x128xf32>
    %c0_6 = arith.constant 0 : index
    %c0_7 = arith.constant 0 : index
    %9 = vector.load %arg4[%c0_6, %c0_7] : memref<1x128xf32, #tpu.memory_space<vmem>>, vector<1x128xf32>
    %10 = vector.shape_cast %9 : vector<1x128xf32> to vector<1x1x128xf32>
    %11 = vector.broadcast %10 : vector<1x1x128xf32> to vector<16x8x128xf32>
    %12 = arith.mulf %8, %11 : vector<16x8x128xf32>
    %cst_8 = arith.constant dense<0.000000e+00> : vector<16x8xf32>
    %13 = vector.multi_reduction <add>, %12, %cst_8 [2] : vector<16x8x128xf32> to vector<16x8xf32>
    %14 = vector.shape_cast %13 : vector<16x8xf32> to vector<16x8x1xf32>
    %cst_9 = arith.constant dense<0xFF800000> : vector<16x1xf32>
    %15 = vector.multi_reduction <maximumf>, %14, %cst_9 [1] : vector<16x8x1xf32> to vector<16x1xf32>
    %16 = vector.shape_cast %15 : vector<16x1xf32> to vector<16x1x1xf32>
    %17 = vector.broadcast %16 : vector<16x1x1xf32> to vector<16x8x1xf32>
    %18 = arith.subf %14, %17 : vector<16x8x1xf32>
    %19 = math.exp %18 : vector<16x8x1xf32>
    %20 = vector.broadcast %19 : vector<16x8x1xf32> to vector<16x8x128xf32>
    %21 = arith.mulf %20, %0 : vector<16x8x128xf32>
    %cst_10 = arith.constant dense<0.000000e+00> : vector<16x128xf32>
    %22 = vector.multi_reduction <add>, %21, %cst_10 [1] : vector<16x8x128xf32> to vector<16x128xf32>
    %cst_11 = arith.constant dense<0.000000e+00> : vector<16x1xf32>
    %23 = vector.multi_reduction <add>, %19, %cst_11 [1] : vector<16x8x1xf32> to vector<16x1xf32>
    %24 = tpu.reciprocal %23 : vector<16x1xf32> -> vector<16x1xf32>
    %25 = vector.broadcast %24 : vector<16x1xf32> to vector<16x128xf32>
    %26 = arith.mulf %22, %25 : vector<16x128xf32>
    %c0_12 = arith.constant 0 : index
    %c0_13 = arith.constant 0 : index
    %27 = vector.load %arg5[%c0_12, %c0_13] : memref<16x128xf32, #tpu.memory_space<vmem>>, vector<16x128xf32>
    tpu.vector_store %arg5[%c0_12, %c0_13], %26 {strides = array<i32>} : memref<16x128xf32, #tpu.memory_space<vmem>>, vector<16x128xf32>,
    return
  }
  func.func @transform_0(%arg0: i32) -> (i32, i32, i32) {
    %c0_i32 = arith.constant 0 : i32
    %c0_i32_0 = arith.constant 0 : i32
    %c0_i32_1 = arith.constant 0 : i32
    return %arg0, %c0_i32, %c0_i32_0 : i32, i32, i32
  }
  func.func @transform_1(%arg0: i32) -> (i32, i32) {
    %c0_i32 = arith.constant 0 : i32
    %c0_i32_0 = arith.constant 0 : i32
    %c0_i32_1 = arith.constant 0 : i32
    return %c0_i32, %c0_i32_0 : i32, i32
  }
  func.func @transform_2(%arg0: i32) -> (i32, i32) {
    %c0_i32 = arith.constant 0 : i32
    %c0_i32_0 = arith.constant 0 : i32
    %c0_i32_1 = arith.constant 0 : i32
    return %c0_i32, %c0_i32_0 : i32, i32
  }
  func.func @transform_3(%arg0: i32) -> (i32, i32) {
    %c0_i32 = arith.constant 0 : i32
    %c0_i32_0 = arith.constant 0 : i32
    %c0_i32_1 = arith.constant 0 : i32
    return %c0_i32, %c0_i32_0 : i32, i32
  }
  func.func @transform_4(%arg0: i32) -> (i32, i32) {
    %c0_i32 = arith.constant 0 : i32
    %c0_i32_0 = arith.constant 0 : i32
    return %arg0, %c0_i32 : i32, i32
  }
}

module attributes {stable_mosaic.version = 11 : i64} {
  func.func @_semantic_attention_kernel(%arg0: i32, %arg1: memref<16x8x128xf32, #tpu.memory_space<vmem>>, %arg2: memref<128x128xf32, #tpu.memory_space<vmem>>, %arg3: memref<1x128xf32, #tpu.memory_space<vmem>>, %arg4: memref<1x128xf32, #tpu.memory_space<vmem>>, %arg5: memref<16x128xf32, #tpu.memory_space<vmem>>) attributes {dimension_semantics = [#tpu.dimension_semantics<parallel>], iteration_bounds = array<i64: 2>, scalar_prefetch = 0 : i64, scratch_operands = 0 : i64, tpu.core_type = #tpu.core_type<tc>, window_params = [{transform_indices = @transform_0, window_bounds = array<i64: 16, 8, 128>}, {pipeline_mode = #tpu.pipeline_mode<synchronous>, transform_indices = @transform_1, window_bounds = array<i64: 128, 128>}, {pipeline_mode = #tpu.pipeline_mode<synchronous>, transform_indices = @transform_2, window_bounds = array<i64: 1, 128>}, {pipeline_mode = #tpu.pipeline_mode<synchronous>, transform_indices = @transform_3, window_bounds = array<i64: 1, 128>}, {transform_indices = @transform_4, window_bounds = array<i64: 16, 128>}]} {
    %c0 = arith.constant 0 : index
    %c0_0 = arith.constant 0 : index
    %c0_1 = arith.constant 0 : index
    %0 = vector.load %arg1[%c0, %c0_0, %c0_1] : memref<16x8x128xf32, #tpu.memory_space<vmem>>, vector<16x8x128xf32>
    %1 = vector.shape_cast %0 : vector<16x8x128xf32> to vector<128x128xf32>
    %c0_2 = arith.constant 0 : index
    %c0_3 = arith.constant 0 : index
    %2 = vector.load %arg2[%c0_2, %c0_3] : memref<128x128xf32, #tpu.memory_space<vmem>>, vector<128x128xf32>
    %cst = arith.constant dense<0.000000e+00> : vector<128x128xf32>
    %3 = tpu.matmul %1, %2, %cst {dimension_numbers = #tpu.dot_dimension_numbers<[1], [0], [0], [1], [0, 0, 1, 1], [], []>} : vector<128x128xf32>, vector<128x128xf32>, vector<128x128xf32> -> vector<128x128xf32>
    %c0_4 = arith.constant 0 : index
    %c0_5 = arith.constant 0 : index
    %4 = vector.load %arg3[%c0_4, %c0_5] : memref<1x128xf32, #tpu.memory_space<vmem>>, vector<1x128xf32>
    %5 = vector.broadcast %4 : vector<1x128xf32> to vector<128x128xf32>
    %6 = arith.addf %3, %5 : vector<128x128xf32>
    %7 = math.tanh %6 : vector<128x128xf32>
    %8 = vector.shape_cast %7 : vector<128x128xf32> to vector<16x8x128xf32>
    %c0_6 = arith.constant 0 : index
    %c0_7 = arith.constant 0 : index
    %9 = vector.load %arg4[%c0_6, %c0_7] : memref<1x128xf32, #tpu.memory_space<vmem>>, vector<1x128xf32>
    %10 = vector.shape_cast %9 : vector<1x128xf32> to vector<1x1x128xf32>
    %11 = vector.broadcast %10 : vector<1x1x128xf32> to vector<16x8x128xf32>
    %12 = arith.mulf %8, %11 : vector<16x8x128xf32>
    %cst_8 = arith.constant dense<0.000000e+00> : vector<16x8xf32>
    %13 = vector.multi_reduction <add>, %12, %cst_8 [2] : vector<16x8x128xf32> to vector<16x8xf32>
    %14 = vector.shape_cast %13 : vector<16x8xf32> to vector<16x8x1xf32>
    %cst_9 = arith.constant dense<0xFF800000> : vector<16x1xf32>
    %15 = vector.multi_reduction <maximumf>, %14, %cst_9 [1] : vector<16x8x1xf32> to vector<16x1xf32>
    %16 = vector.shape_cast %15 : vector<16x1xf32> to vector<16x1x1xf32>
    %17 = vector.broadcast %16 : vector<16x1x1xf32> to vector<16x8x1xf32>
    %18 = arith.subf %14, %17 : vector<16x8x1xf32>
    %19 = math.exp %18 : vector<16x8x1xf32>
    %20 = vector.broadcast %19 : vector<16x8x1xf32> to vector<16x8x128xf32>
    %21 = arith.mulf %20, %0 : vector<16x8x128xf32>
    %cst_10 = arith.constant dense<0.000000e+00> : vector<16x128xf32>
    %22 = vector.multi_reduction <add>, %21, %cst_10 [1] : vector<16x8x128xf32> to vector<16x128xf32>
    %cst_11 = arith.constant dense<0.000000e+00> : vector<16x1xf32>
    %23 = vector.multi_reduction <add>, %19, %cst_11 [1] : vector<16x8x1xf32> to vector<16x1xf32>
    %24 = tpu.reciprocal %23 : vector<16x1xf32> -> vector<16x1xf32>
    %25 = vector.broadcast %24 : vector<16x1xf32> to vector<16x128xf32>
    %26 = arith.mulf %22, %25 : vector<16x128xf32>
    %c0_12 = arith.constant 0 : index
    %c0_13 = arith.constant 0 : index
    %27 = vector.load %arg5[%c0_12, %c0_13] : memref<16x128xf32, #tpu.memory_space<vmem>>, vector<16x128xf32>
    tpu.vector_store %arg5[%c0_12, %c0_13], %26 {strides = array<i32>} : memref<16x128xf32, #tpu.memory_space<vmem>>, vector<16x128xf32>,
    return
  }
  func.func @transform_0(%arg0: i32) -> (i32, i32, i32) {
    %c0_i32 = arith.constant 0 : i32
    %c0_i32_0 = arith.constant 0 : i32
    %c0_i32_1 = arith.constant 0 : i32
    return %arg0, %c0_i32, %c0_i32_0 : i32, i32, i32
  }
  func.func @transform_1(%arg0: i32) -> (i32, i32) {
    %c0_i32 = arith.constant 0 : i32
    %c0_i32_0 = arith.constant 0 : i32
    %c0_i32_1 = arith.constant 0 : i32
    return %c0_i32, %c0_i32_0 : i32, i32
  }
  func.func @transform_2(%arg0: i32) -> (i32, i32) {
    %c0_i32 = arith.constant 0 : i32
    %c0_i32_0 = arith.constant 0 : i32
    %c0_i32_1 = arith.constant 0 : i32
    return %c0_i32, %c0_i32_0 : i32, i32
  }
  func.func @transform_3(%arg0: i32) -> (i32, i32) {
    %c0_i32 = arith.constant 0 : i32
    %c0_i32_0 = arith.constant 0 : i32
    %c0_i32_1 = arith.constant 0 : i32
    return %c0_i32, %c0_i32_0 : i32, i32
  }
  func.func @transform_4(%arg0: i32) -> (i32, i32) {
    %c0_i32 = arith.constant 0 : i32
    %c0_i32_0 = arith.constant 0 : i32
    return %arg0, %c0_i32 : i32, i32
  }
}

</mosaic_0001>

<llo_original>
// kernel: tpu_custom_call.1
$region0: #{tpu_custom_call.1}
  #allocation0 [shape = 'u32[]', space=smem, size = 0x4, offset = 0x4, fixed_abs, tag = 'smem constant byte address 0x4 - core index']
  #allocation1 [shape = 'u32[144,128]{1,0:T(1,128)}', space=vmem, size = 0x12000, scoped, tag = 'internal scratch']
  %s0 = inlined_call_operand.hbm [shape: f32[32,8,128], index: 0, kind: input, shape index: {}]
  %s1 = inlined_call_operand.hbm [shape: f32[128,128], index: 1, kind: input, shape index: {}]
  %s2 = inlined_call_operand.vmem [shape: f32[1,128], index: 2, kind: input, shape index: {}]
  %s3 = inlined_call_operand.vmem [shape: f32[1,128], index: 3, kind: input, shape index: {}]
  %s4 = inlined_call_operand.hbm [shape: f32[32,128], index: 4, kind: output, shape index: {}]
  %s5 = sld [smem:[#allocation0]]
  $region57: #{tpu_custom_call.1} parent=0
    _
  %s7 = ssub.s32 1, %s5
  %s8 = scalar_select 0, %s7, %s5
  $region1: #{tpu_custom_call.1} parent=0
    #allocation2 [shape = 'u8[131072]{0}', space=vmem, size = 0x20000, scoped, tag = 'input window, operand 0']
    #allocation3 [shape = 's32[2]{0}', space=sflag, size = 0x8, scoped, tag = 'scoped memory for tpu_custom_call.1']
    #allocation4 [shape = 's32[2]{0}', space=sflag, size = 0x8, scoped, tag = 'scoped memory for tpu_custom_call.1']
    #allocation5 [shape = 'u8[65536]{0}', space=vmem, size = 0x10000, scoped, tag = 'input window, operand 1, single buffered']
    #allocation6 [shape = 's32[1]{0}', space=sflag, size = 0x4, scoped, tag = 'scoped memory for tpu_custom_call.1']
    #allocation7 [shape = 'u8[16384]{0}', space=vmem, size = 0x4000, scoped, tag = 'output window, operand 0']
    %9 = vsyncpa [#allocation3], 0
    %s10 = scalar_lea.sflag [#allocation3], 1
    %11 = vsyncpa %s10, 0
    %12 = vsyncpa [#allocation6], 0
    %13 = vsyncpa [#allocation4], 0
    %s14 = scalar_lea.sflag [#allocation4], 1
    %15 = vsyncpa %s14, 0
    loop: start=0, step=1, limit=4
    $region2: #{tpu_custom_call.1} parent=1 // loop_pre_header
      _
    $region3: #{tpu_custom_call.1} parent=1 // loop_header
      %s17 = sphi 0, %s21
      %p18 = scmp.ge.s32.totalorder %s17, 4
      %s27 = sphi 0, %s29
      %s30 = sphi 0, %s27
      %s31 = sphi 0, %s30
      %s47 = sphi 0, %s31
      %s51 = sphi 0, %s51
      %s53 = sphi 0, %s51
      %s54 = sphi 0, %s53
      %s68 = sphi 0, %s54
      %s72 = sphi 0, %s72
      %s74 = sphi 0, %s72
      %s75 = sphi 0, %s74
      %s89 = sphi 0, %s75
      %s93 = sphi 0, %s93
      %s95 = sphi 0, %s93
      %s96 = sphi 0, %s95
      %s110 = sphi 0, %s96
      %s116 = sphi 0, %s118
      %s119 = sphi 0, %s116
      %s120 = sphi 0, %s119
      %s136 = sphi 0, %s120
    $region4: #{tpu_custom_call.1} parent=1 // loop_header_branch
      %20 = sbr.rel (%p18) target = $region8
    $region5: #{tpu_custom_call.1} parent=1 // loop_body
      %s22 = ssub.s32 %s17, 1
      %s23 = ssub.s32 %s17, 2
      %s24 = sadd.s32 %s17, 1
      %s25 = ssub.s32 %s17, %s24
      %p26 = scmp.eq.s32.totalorder %s25, 0
      %s28 = sadd.s32 %s27, 1
      %s29 = scalar_select %p26, %s27, %s28
      %p32 = pneg %p26
      %p33 = scmp.eq.s32.totalorder %s17, 1
      %p34 = por %p32, %p33
      %p35 = scmp.ne.s32.totalorder %s27, %s30
      %p36 = scmp.eq.s32.totalorder %s17, 0
      %p37 = por %p35, %p36
      %p38 = scmp.ne.s32.totalorder %s27, %s30
      %p39 = scmp.eq.s32.totalorder %s22, 1
      %p40 = por %p38, %p39
      %p41 = scmp.ne.s32.totalorder %s30, %s31
      %p42 = scmp.eq.s32.totalorder %s22, 0
      %p43 = por %p41, %p42
      %p44 = scmp.ne.s32.totalorder %s30, %s31
      %p45 = scmp.eq.s32.totalorder %s23, 1
      %p46 = por %p44, %p45
      %p48 = scmp.ne.s32.totalorder %s31, %s47
      %p49 = scmp.eq.s32.totalorder %s23, 0
      %p50 = por %p48, %p49
      %s52 = sadd.s32 %s51, 1
      %p55 = scmp.eq.s32.totalorder %s17, 1
      %p56 = scmp.ne.s32.totalorder %s51, %s53
      %p57 = scmp.eq.s32.totalorder %s17, 0
      %p58 = por %p56, %p57
      %p59 = scmp.ne.s32.totalorder %s51, %s53
      %p60 = scmp.eq.s32.totalorder %s22, 1
      %p61 = por %p59, %p60
      %p62 = scmp.ne.s32.totalorder %s53, %s54
      %p63 = scmp.eq.s32.totalorder %s22, 0
      %p64 = por %p62, %p63
      %p65 = scmp.ne.s32.totalorder %s53, %s54
      %p66 = scmp.eq.s32.totalorder %s23, 1
      %p67 = por %p65, %p66
      %p69 = scmp.ne.s32.totalorder %s54, %s68
      %p70 = scmp.eq.s32.totalorder %s23, 0
      %p71 = por %p69, %p70
      %s73 = sadd.s32 %s72, 1
      %p76 = scmp.eq.s32.totalorder %s17, 1
      %p77 = scmp.ne.s32.totalorder %s72, %s74
      %p78 = scmp.eq.s32.totalorder %s17, 0
      %p79 = por %p77, %p78
      %p80 = scmp.ne.s32.totalorder %s72, %s74
      %p81 = scmp.eq.s32.totalorder %s22, 1
      %p82 = por %p80, %p81
      %p83 = scmp.ne.s32.totalorder %s74, %s75
      %p84 = scmp.eq.s32.totalorder %s22, 0
      %p85 = por %p83, %p84
      %p86 = scmp.ne.s32.totalorder %s74, %s75
      %p87 = scmp.eq.s32.totalorder %s23, 1
      %p88 = por %p86, %p87
      %p90 = scmp.ne.s32.totalorder %s75, %s89
      %p91 = scmp.eq.s32.totalorder %s23, 0
      %p92 = por %p90, %p91
      %s94 = sadd.s32 %s93, 1
      %p97 = scmp.eq.s32.totalorder %s17, 1
      %p98 = scmp.ne.s32.totalorder %s93, %s95
      %p99 = scmp.eq.s32.totalorder %s17, 0
      %p100 = por %p98, %p99
      %p101 = scmp.ne.s32.totalorder %s93, %s95
      %p102 = scmp.eq.s32.totalorder %s22, 1
      %p103 = por %p101, %p102
      %p104 = scmp.ne.s32.totalorder %s95, %s96
      %p105 = scmp.eq.s32.totalorder %s22, 0
      %p106 = por %p104, %p105
      %p107 = scmp.ne.s32.totalorder %s95, %s96
      %p108 = scmp.eq.s32.totalorder %s23, 1
      %p109 = por %p107, %p108
      %p111 = scmp.ne.s32.totalorder %s96, %s110
      %p112 = scmp.eq.s32.totalorder %s23, 0
      %p113 = por %p111, %p112
      %s114 = ssub.s32 %s17, %s24
      %p115 = scmp.eq.s32.totalorder %s114, 0
      %s117 = sadd.s32 %s116, 1
      %s118 = scalar_select %p115, %s116, %s117
      %p121 = pneg %p115
      %p122 = scmp.eq.s32.totalorder %s17, 1
      %p123 = por %p121, %p122
      %p124 = scmp.ne.s32.totalorder %s116, %s119
      %p125 = scmp.eq.s32.totalorder %s17, 0
      %p126 = por %p124, %p125
      %p127 = scmp.ne.s32.totalorder %s116, %s119
      %p128 = scmp.eq.s32.totalorder %s22, 1
      %p129 = por %p127, %p128
      %p130 = scmp.ne.s32.totalorder %s119, %s120
      %p131 = scmp.eq.s32.totalorder %s22, 0
      %p132 = por %p130, %p131
      %p133 = scmp.ne.s32.totalorder %s119, %s120
      %p134 = scmp.eq.s32.totalorder %s23, 1
      %p135 = por %p133, %p134
      %p137 = scmp.ne.s32.totalorder %s120, %s136
      %p138 = scmp.eq.s32.totalorder %s23, 0
      %p139 = por %p137, %p138
      %p140 = scmp.le.s32.totalorder 1, %s17
      %p141 = scmp.lt.s32.totalorder %s17, 3
      %p142 = pnand %p140, %p141
      %p143 = pneg %p142
      // Predicated region
      $region9: #{tpu_custom_call.1} parent=5 // pred_check
        _
      $region10: #{tpu_custom_call.1} parent=5 // pred_check_branch
        %145 = sbr.rel (%p142) target = $region12
      $region11: #{tpu_custom_call.1} parent=5 // pred_region
        %s146 = ssub.s32 %s17, 1
        // Predicated region
        $region13: #{tpu_custom_call.1} parent=11 // pred_check
          %p147 = pneg %p64
        $region14: #{tpu_custom_call.1} parent=11 // pred_check_branch
          %149 = sbr.rel (%p147) target = $region16
        $region15: #{tpu_custom_call.1} parent=11 // pred_region
          %s151 = ssub.s32 2048, 2048
          %152 = vsyncadd [#allocation6], %s151
          %s153 = sshll.u32 [#allocation5], 4
          %s154 = int_to_ptr.vmem [resolvable:$true] %s153
          %159 = dma.hbm_to_vmem [thread:$0]  %s1, 2048, %s154, [#allocation6], 128, 128, 8
        $region16: #{tpu_custom_call.1} parent=11 // pred_fallthru
          _
        // Predicated region
        $region17: #{tpu_custom_call.1} parent=11 // pred_check
          %p160 = pneg %p85
        $region18: #{tpu_custom_call.1} parent=11 // pred_check_branch
          %162 = sbr.rel (%p160) target = $region20
        $region19: #{tpu_custom_call.1} parent=11 // pred_region
          _
        $region20: #{tpu_custom_call.1} parent=11 // pred_fallthru
          _
        // Predicated region
        $region21: #{tpu_custom_call.1} parent=11 // pred_check
          %p163 = pneg %p106
        $region22: #{tpu_custom_call.1} parent=11 // pred_check_branch
          %165 = sbr.rel (%p163) target = $region24
        $region23: #{tpu_custom_call.1} parent=11 // pred_region
          _
        $region24: #{tpu_custom_call.1} parent=11 // pred_fallthru
          _
      $region12: #{tpu_custom_call.1} parent=5 // pred_fallthru
        _
      %p166 = scmp.lt.s32.totalorder %s17, 2
      // Predicated region
      $region25: #{tpu_custom_call.1} parent=5 // pred_check
        %p167 = pneg %p166
      $region26: #{tpu_custom_call.1} parent=5 // pred_check_branch
        %169 = sbr.rel (%p167) target = $region28
      $region27: #{tpu_custom_call.1} parent=5 // pred_region
        // Predicated region
        $region29: #{tpu_custom_call.1} parent=27 // pred_check
          %p170 = pneg %p37
        $region30: #{tpu_custom_call.1} parent=27 // pred_check_branch
          %172 = sbr.rel (%p170) target = $region32
        $region31: #{tpu_custom_call.1} parent=27 // pred_region
          %s173 = sand.u32 %s27, 1
          %s174 = scalar_lea.sflag [#allocation3], %s173
          %s175 = sand.u32 %s27, 1
          %s176 = smul.addr %s175, 128
          %s177 = scalar_lea.vmem [#allocation2], %s176
          %s178 = smul.u32 16, %s17
          %s180 = ssub.s32 2048, 2048
          %181 = vsyncadd %s174, %s180
          %s182 = smul.addr %s178, 128
          %s183 = scalar_lea.hbm %s0, %s182
          %s184 = sshll.u32 %s177, 4
          %s185 = int_to_ptr.vmem [resolvable:$true] %s184
          %190 = dma.hbm_to_vmem [thread:$0]  %s183, 2048, %s185, %s174, 128, 128, 8
        $region32: #{tpu_custom_call.1} parent=27 // pred_fallthru
          _
      $region28: #{tpu_custom_call.1} parent=5 // pred_fallthru
        _
      %p191 = scmp.le.s32.totalorder 1, %s17
      %p192 = scmp.lt.s32.totalorder %s17, 3
      %p193 = pnand %p191, %p192
      %p194 = pneg %p193
      // Predicated region
      $region33: #{tpu_custom_call.1} parent=5 // pred_check
        _
      $region34: #{tpu_custom_call.1} parent=5 // pred_check_branch
        %196 = sbr.rel (%p193) target = $region36
      $region35: #{tpu_custom_call.1} parent=5 // pred_region
        %s197 = ssub.s32 %s17, 1
        %s198 = sand.u32 %s30, 1
        %s199 = scalar_lea.sflag [#allocation3], %s198
        %s200 = sand.u32 %s30, 1
        %s201 = smul.addr %s200, 128
        %s202 = scalar_lea.vmem [#allocation2], %s201
        // Predicated region
        $region37: #{tpu_custom_call.1} parent=35 // pred_check
          %p203 = pneg %p43
        $region38: #{tpu_custom_call.1} parent=35 // pred_check_branch
          %205 = sbr.rel (%p203) target = $region40
        $region39: #{tpu_custom_call.1} parent=35 // pred_region
          %206 = dma.done %s199, 2048
        $region40: #{tpu_custom_call.1} parent=35 // pred_fallthru
          _
        // Predicated region
        $region41: #{tpu_custom_call.1} parent=35 // pred_check
          %p207 = pneg %p64
        $region42: #{tpu_custom_call.1} parent=35 // pred_check_branch
          %209 = sbr.rel (%p207) target = $region44
        $region43: #{tpu_custom_call.1} parent=35 // pred_region
          %210 = dma.done [#allocation6], 2048
        $region44: #{tpu_custom_call.1} parent=35 // pred_fallthru
          _
        %s211 = sand.u32 %s30, 1
        %s212 = scalar_lea.sflag [#allocation3], %s211
        %s213 = sand.u32 %s30, 1
        %s214 = smul.addr %s213, 128
        %s215 = scalar_lea.vmem [#allocation2], %s214
        %p216 = pneg %p43
        %p217 = pneg %p40
        %p218 = pneg %p64
        %p219 = pneg %p61
        %p220 = pneg %p85
        %p221 = pneg %p82
        %p222 = pneg %p106
        %p223 = pneg %p103
        %p224 = pneg %p132
        %p225 = pneg %p129
        %s226 = sand.u32 %s119, 1
        %s227 = scalar_lea.sflag [#allocation4], %s226
        %s228 = sand.u32 %s119, 1
        %s229 = smul.addr %s228, 16
        %s230 = scalar_lea.vmem [#allocation7], %s229
        %s231 = smul.u32 16, %s22
        %s232 = smul.u32 2, %s22
        %v233 = vld [vmem:[%s202] sm:$0xff]
        %v234 = vld [vmem:[%s202 + $0x8] sm:$0xff]
        %v235 = vld [vmem:[%s202 + $0x10] sm:$0xff]
        %v236 = vld [vmem:[%s202 + $0x18] sm:$0xff]
        %v237 = vld [vmem:[%s202 + $0x20] sm:$0xff]
        %v238 = vld [vmem:[%s202 + $0x28] sm:$0xff]
        %v239 = vld [vmem:[%s202 + $0x30] sm:$0xff]
        %v240 = vld [vmem:[%s202 + $0x38] sm:$0xff]
        %v241 = vld [vmem:[%s202 + $0x40] sm:$0xff]
        %v242 = vld [vmem:[%s202 + $0x48] sm:$0xff]
        %v243 = vld [vmem:[%s202 + $0x50] sm:$0xff]
        %v244 = vld [vmem:[%s202 + $0x58] sm:$0xff]
        %v245 = vld [vmem:[%s202 + $0x60] sm:$0xff]
        %v246 = vld [vmem:[%s202 + $0x68] sm:$0xff]
        %v247 = vld [vmem:[%s202 + $0x70] sm:$0xff]
        %v248 = vld [vmem:[%s202 + $0x78] sm:$0xff]
        %v249 = vld [vmem:[#allocation5] sm:$0xff]
        %v250 = vld [vmem:[#allocation5 + $0x8] sm:$0xff]
        %v251 = vld [vmem:[#allocation5 + $0x10] sm:$0xff]
        %v252 = vld [vmem:[#allocation5 + $0x18] sm:$0xff]
        %v253 = vld [vmem:[#allocation5 + $0x20] sm:$0xff]
        %v254 = vld [vmem:[#allocation5 + $0x28] sm:$0xff]
        %v255 = vld [vmem:[#allocation5 + $0x30] sm:$0xff]
        %v256 = vld [vmem:[#allocation5 + $0x38] sm:$0xff]
        %v257 = vld [vmem:[#allocation5 + $0x40] sm:$0xff]
        %v258 = vld [vmem:[#allocation5 + $0x48] sm:$0xff]
        %v259 = vld [vmem:[#allocation5 + $0x50] sm:$0xff]
        %v260 = vld [vmem:[#allocation5 + $0x58] sm:$0xff]
        %v261 = vld [vmem:[#allocation5 + $0x60] sm:$0xff]
        %v262 = vld [vmem:[#allocation5 + $0x68] sm:$0xff]
        %v263 = vld [vmem:[#allocation5 + $0x70] sm:$0xff]
        %v264 = vld [vmem:[#allocation5 + $0x78] sm:$0xff]
        %v265 = vld [vmem:[%s2] sm:$0x1]
        %v267 = vlaneseq
        %v268 = vshrl.u32 %v267, 7
        %v269 = vsub.s32 0, %v268
        %v270 = vrot.slane %v265, %v269
        %272 = vmatprep.subr.mxu0 0.0
        %273 = vmatpush1.msra.mxu0 %v264
        %274 = vmatprep.subr.mxu0 0.0
        %275 = vmatpush1.msra.mxu0 %v263
        %276 = vmatprep.subr.mxu0 0.0
        %277 = vmatpush1.msra.mxu0 %v262
        %278 = vmatprep.subr.mxu0 0.0
        %279 = vmatpush1.msra.mxu0 %v261
        %280 = vmatprep.subr.mxu0 0.0
        %281 = vmatpush1.msra.mxu0 %v260
        %282 = vmatprep.subr.mxu0 0.0
        %283 = vmatpush1.msra.mxu0 %v259
        %284 = vmatprep.subr.mxu0 0.0
        %285 = vmatpush1.msra.mxu0 %v258
        %286 = vmatprep.subr.mxu0 0.0
        %287 = vmatpush1.msra.mxu0 %v257
        %288 = vmatprep.subr.mxu0 0.0
        %289 = vmatpush1.msra.mxu0 %v256
        %290 = vmatprep.subr.mxu0 0.0
        %291 = vmatpush1.msra.mxu0 %v255
        %292 = vmatprep.subr.mxu0 0.0
        %293 = vmatpush1.msra.mxu0 %v254
        %294 = vmatprep.subr.mxu0 0.0
        %295 = vmatpush1.msra.mxu0 %v253
        %296 = vmatprep.subr.mxu0 0.0
        %297 = vmatpush1.msra.mxu0 %v252
        %298 = vmatprep.subr.mxu0 0.0
        %299 = vmatpush1.msra.mxu0 %v251
        %300 = vmatprep.subr.mxu0 0.0
        %301 = vmatpush1.msra.mxu0 %v250
        %302 = vmatprep.subr.mxu0 0.0
        %303 = vmatpush1.msra.mxu0 %v249
        %304 = vmatprep.subr.mxu0 0.0
        %305 = vmatpush2.msra.mxu0 0.0
        %306 = vmatprep.subr.mxu0 0.0
        %307 = vmatpush2.msra.mxu0 0.0
        %308 = vmatprep.subr.mxu0 0.0
        %309 = vmatpush2.msra.mxu0 0.0
        %310 = vmatprep.subr.mxu0 0.0
        %311 = vmatpush2.msra.mxu0 0.0
        %312 = vmatprep.subr.mxu0 0.0
        %313 = vmatpush2.msra.mxu0 0.0
        %314 = vmatprep.subr.mxu0 0.0
        %315 = vmatpush2.msra.mxu0 0.0
        %316 = vmatprep.subr.mxu0 0.0
        %317 = vmatpush2.msra.mxu0 0.0
        %318 = vmatprep.subr.mxu0 0.0
        %319 = vmatpush2.msra.mxu0 0.0
        %320 = vmatprep.subr.mxu0 0.0
        %321 = vmatpush2.msra.mxu0 0.0
        %322 = vmatprep.subr.mxu0 0.0
        %323 = vmatpush2.msra.mxu0 0.0
        %324 = vmatprep.subr.mxu0 0.0
        %325 = vmatpush2.msra.mxu0 0.0
        %326 = vmatprep.subr.mxu0 0.0
        %327 = vmatpush2.msra.mxu0 0.0
        %328 = vmatprep.subr.mxu0 0.0
        %329 = vmatpush2.msra.mxu0 0.0
        %330 = vmatprep.subr.mxu0 0.0
        %331 = vmatpush2.msra.mxu0 0.0
        %332 = vmatprep.subr.mxu0 0.0
        %333 = vmatpush2.msra.mxu0 0.0
        %334 = vmatprep.subr.mxu0 0.0
        %335 = vmatpush2.msra.mxu0 0.0
        %336 = vmatprep.mubr.f32.mxu0 0.0
        %337 = vmatmul.mubr.f32.gmra.mxu0 %v233
        %v338 = vpop.f32.mrf.mxu0
        %v339 = vadd.f32 %v270, %v338
        %v340 = vpop.f32.mrf.mxu0
        %341 = vmatprep.mubr.f32.mxu0 0.0
        %342 = vmatmul.mubr.f32.gmra.mxu0 %v234
        %v343 = vpop.f32.mrf.mxu0
        %v344 = vadd.f32 %v270, %v343
        %v345 = vpop.f32.mrf.mxu0
        %346 = vmatprep.mubr.f32.mxu0 0.0
        %347 = vmatmul.mubr.f32.gmra.mxu0 %v235
        %v348 = vpop.f32.mrf.mxu0
        %v349 = vadd.f32 %v270, %v348
        %v350 = vpop.f32.mrf.mxu0
        %351 = vmatprep.mubr.f32.mxu0 0.0
        %352 = vmatmul.mubr.f32.gmra.mxu0 %v236
        %v353 = vpop.f32.mrf.mxu0
        %v354 = vadd.f32 %v270, %v353
        %v355 = vpop.f32.mrf.mxu0
        %356 = vmatprep.mubr.f32.mxu0 0.0
        %357 = vmatmul.mubr.f32.gmra.mxu0 %v237
        %v358 = vpop.f32.mrf.mxu0
        %v359 = vadd.f32 %v270, %v358
        %v360 = vpop.f32.mrf.mxu0
        %361 = vmatprep.mubr.f32.mxu0 0.0
        %362 = vmatmul.mubr.f32.gmra.mxu0 %v238
        %v363 = vpop.f32.mrf.mxu0
        %v364 = vadd.f32 %v270, %v363
        %v365 = vpop.f32.mrf.mxu0
        %366 = vmatprep.mubr.f32.mxu0 0.0
        %367 = vmatmul.mubr.f32.gmra.mxu0 %v239
        %v368 = vpop.f32.mrf.mxu0
        %v369 = vadd.f32 %v270, %v368
        %v370 = vpop.f32.mrf.mxu0
        %371 = vmatprep.mubr.f32.mxu0 0.0
        %372 = vmatmul.mubr.f32.gmra.mxu0 %v240
        %v373 = vpop.f32.mrf.mxu0
        %v374 = vadd.f32 %v270, %v373
        %v375 = vpop.f32.mrf.mxu0
        %376 = vmatprep.mubr.f32.mxu0 0.0
        %377 = vmatmul.mubr.f32.gmra.mxu0 %v241
        %v378 = vpop.f32.mrf.mxu0
        %v379 = vadd.f32 %v270, %v378
        %v380 = vpop.f32.mrf.mxu0
        %381 = vmatprep.mubr.f32.mxu0 0.0
        %382 = vmatmul.mubr.f32.gmra.mxu0 %v242
        %v383 = vpop.f32.mrf.mxu0
        %v384 = vadd.f32 %v270, %v383
        %v385 = vpop.f32.mrf.mxu0
        %386 = vmatprep.mubr.f32.mxu0 0.0
        %387 = vmatmul.mubr.f32.gmra.mxu0 %v243
        %v388 = vpop.f32.mrf.mxu0
        %v389 = vadd.f32 %v270, %v388
        %v390 = vpop.f32.mrf.mxu0
        %391 = vmatprep.mubr.f32.mxu0 0.0
        %392 = vmatmul.mubr.f32.gmra.mxu0 %v244
        %v393 = vpop.f32.mrf.mxu0
        %v394 = vadd.f32 %v270, %v393
        %v395 = vpop.f32.mrf.mxu0
        %396 = vmatprep.mubr.f32.mxu0 0.0
        %397 = vmatmul.mubr.f32.gmra.mxu0 %v245
        %v398 = vpop.f32.mrf.mxu0
        %v399 = vadd.f32 %v270, %v398
        %v400 = vpop.f32.mrf.mxu0
        %401 = vmatprep.mubr.f32.mxu0 0.0
        %402 = vmatmul.mubr.f32.gmra.mxu0 %v246
        %v403 = vpop.f32.mrf.mxu0
        %v404 = vadd.f32 %v270, %v403
        %v405 = vpop.f32.mrf.mxu0
        %406 = vmatprep.mubr.f32.mxu0 0.0
        %407 = vmatmul.mubr.f32.gmra.mxu0 %v247
        %v408 = vpop.f32.mrf.mxu0
        %v409 = vadd.f32 %v270, %v408
        %v410 = vpop.f32.mrf.mxu0
        %411 = vmatprep.mubr.f32.mxu0 0.0
        %412 = vmatmul.mubr.f32.gmra.mxu0 %v248
        %v413 = vpop.f32.mrf.mxu0
        %v414 = vadd.f32 %v270, %v413
        %v415 = vpop.f32.mrf.mxu0
        %416 = vdwg.mxu0
        %v417 = vtanh.pop %v339
        %v418 = vtanh.pop %v344
        %v419 = vtanh.pop %v349
        %v420 = vtanh.pop %v354
        %v421 = vtanh.pop %v359
        %v422 = vtanh.pop %v364
        %v423 = vtanh.pop %v369
        %v424 = vtanh.pop %v374
        %v425 = vtanh.pop %v379
        %v426 = vtanh.pop %v384
        %v427 = vtanh.pop %v389
        %v428 = vtanh.pop %v394
        %v429 = vtanh.pop %v399
        %v430 = vtanh.pop %v404
        %v431 = vtanh.pop %v409
        %v432 = vtanh.pop %v414
        %v433 = vld [vmem:[%s3] sm:$0x1]
        %v435 = vlaneseq
        %v436 = vshrl.u32 %v435, 7
        %v437 = vsub.s32 0, %v436
        %v438 = vrot.slane %v433, %v437
        %v440 = vmul.f32 %v417, %v438
        %v441 = vmul.f32 %v418, %v438
        %v442 = vmul.f32 %v419, %v438
        %v443 = vmul.f32 %v420, %v438
        %v444 = vmul.f32 %v421, %v438
        %v445 = vmul.f32 %v422, %v438
        %v446 = vmul.f32 %v423, %v438
        %v447 = vmul.f32 %v424, %v438
        %v448 = vmul.f32 %v425, %v438
        %v449 = vmul.f32 %v426, %v438
        %v450 = vmul.f32 %v427, %v438
        %v451 = vmul.f32 %v428, %v438
        %v452 = vmul.f32 %v429, %v438
        %v453 = vmul.f32 %v430, %v438
        %v454 = vmul.f32 %v431, %v438
        %v455 = vmul.f32 %v432, %v438
        %456 = vadd.xlane.f32.xlu0 %v440
        %v457 = vpop.xlane.xlu0 %456
        %458 = vadd.xlane.f32.xlu0 %v441
        %v459 = vpop.xlane.xlu0 %458
        %460 = vadd.xlane.f32.xlu0 %v442
        %v461 = vpop.xlane.xlu0 %460
        %462 = vadd.xlane.f32.xlu0 %v443
        %v463 = vpop.xlane.xlu0 %462
        %464 = vadd.xlane.f32.xlu0 %v444
        %v465 = vpop.xlane.xlu0 %464
        %466 = vadd.xlane.f32.xlu0 %v445
        %v467 = vpop.xlane.xlu0 %466
        %468 = vadd.xlane.f32.xlu0 %v446
        %v469 = vpop.xlane.xlu0 %468
        %470 = vadd.xlane.f32.xlu0 %v447
        %v471 = vpop.xlane.xlu0 %470
        %472 = vadd.xlane.f32.xlu0 %v448
        %v473 = vpop.xlane.xlu0 %472
        %474 = vadd.xlane.f32.xlu0 %v449
        %v475 = vpop.xlane.xlu0 %474
        %476 = vadd.xlane.f32.xlu0 %v450
        %v477 = vpop.xlane.xlu0 %476
        %478 = vadd.xlane.f32.xlu0 %v451
        %v479 = vpop.xlane.xlu0 %478
        %480 = vadd.xlane.f32.xlu0 %v452
        %v481 = vpop.xlane.xlu0 %480
        %482 = vadd.xlane.f32.xlu0 %v453
        %v483 = vpop.xlane.xlu0 %482
        %484 = vadd.xlane.f32.xlu0 %v454
        %v485 = vpop.xlane.xlu0 %484
        %486 = vadd.xlane.f32.xlu0 %v455
        %v487 = vpop.xlane.xlu0 %486
        %v488 = vrot.slane %v457, 4
        %v489 = vmax.f32 %v457, %v488
        %v490 = vrot.slane %v489, 2
        %v491 = vmax.f32 %v489, %v490
        %v492 = vrot.slane %v491, 1
        %v493 = vmax.f32 %v491, %v492
        %v494 = vrot.slane %v459, 4
        %v495 = vmax.f32 %v459, %v494
        %v496 = vrot.slane %v495, 2
        %v497 = vmax.f32 %v495, %v496
        %v498 = vrot.slane %v497, 1
        %v499 = vmax.f32 %v497, %v498
        %v500 = vrot.slane %v461, 4
        %v501 = vmax.f32 %v461, %v500
        %v502 = vrot.slane %v501, 2
        %v503 = vmax.f32 %v501, %v502
        %v504 = vrot.slane %v503, 1
        %v505 = vmax.f32 %v503, %v504
        %v506 = vrot.slane %v463, 4
        %v507 = vmax.f32 %v463, %v506
        %v508 = vrot.slane %v507, 2
        %v509 = vmax.f32 %v507, %v508
        %v510 = vrot.slane %v509, 1
        %v511 = vmax.f32 %v509, %v510
        %v512 = vrot.slane %v465, 4
        %v513 = vmax.f32 %v465, %v512
        %v514 = vrot.slane %v513, 2
        %v515 = vmax.f32 %v513, %v514
        %v516 = vrot.slane %v515, 1
        %v517 = vmax.f32 %v515, %v516
        %v518 = vrot.slane %v467, 4
        %v519 = vmax.f32 %v467, %v518
        %v520 = vrot.slane %v519, 2
        %v521 = vmax.f32 %v519, %v520
        %v522 = vrot.slane %v521, 1
        %v523 = vmax.f32 %v521, %v522
        %v524 = vrot.slane %v469, 4
        %v525 = vmax.f32 %v469, %v524
        %v526 = vrot.slane %v525, 2
        %v527 = vmax.f32 %v525, %v526
        %v528 = vrot.slane %v527, 1
        %v529 = vmax.f32 %v527, %v528
        %v530 = vrot.slane %v471, 4
        %v531 = vmax.f32 %v471, %v530
        %v532 = vrot.slane %v531, 2
        %v533 = vmax.f32 %v531, %v532
        %v534 = vrot.slane %v533, 1
        %v535 = vmax.f32 %v533, %v534
        %v536 = vrot.slane %v473, 4
        %v537 = vmax.f32 %v473, %v536
        %v538 = vrot.slane %v537, 2
        %v539 = vmax.f32 %v537, %v538
        %v540 = vrot.slane %v539, 1
        %v541 = vmax.f32 %v539, %v540
        %v542 = vrot.slane %v475, 4
        %v543 = vmax.f32 %v475, %v542
        %v544 = vrot.slane %v543, 2
        %v545 = vmax.f32 %v543, %v544
        %v546 = vrot.slane %v545, 1
        %v547 = vmax.f32 %v545, %v546
        %v548 = vrot.slane %v477, 4
        %v549 = vmax.f32 %v477, %v548
        %v550 = vrot.slane %v549, 2
        %v551 = vmax.f32 %v549, %v550
        %v552 = vrot.slane %v551, 1
        %v553 = vmax.f32 %v551, %v552
        %v554 = vrot.slane %v479, 4
        %v555 = vmax.f32 %v479, %v554
        %v556 = vrot.slane %v555, 2
        %v557 = vmax.f32 %v555, %v556
        %v558 = vrot.slane %v557, 1
        %v559 = vmax.f32 %v557, %v558
        %v560 = vrot.slane %v481, 4
        %v561 = vmax.f32 %v481, %v560
        %v562 = vrot.slane %v561, 2
        %v563 = vmax.f32 %v561, %v562
        %v564 = vrot.slane %v563, 1
        %v565 = vmax.f32 %v563, %v564
        %v566 = vrot.slane %v483, 4
        %v567 = vmax.f32 %v483, %v566
        %v568 = vrot.slane %v567, 2
        %v569 = vmax.f32 %v567, %v568
        %v570 = vrot.slane %v569, 1
        %v571 = vmax.f32 %v569, %v570
        %v572 = vrot.slane %v485, 4
        %v573 = vmax.f32 %v485, %v572
        %v574 = vrot.slane %v573, 2
        %v575 = vmax.f32 %v573, %v574
        %v576 = vrot.slane %v575, 1
        %v577 = vmax.f32 %v575, %v576
        %v578 = vrot.slane %v487, 4
        %v579 = vmax.f32 %v487, %v578
        %v580 = vrot.slane %v579, 2
        %v581 = vmax.f32 %v579, %v580
        %v582 = vrot.slane %v581, 1
        %v583 = vmax.f32 %v581, %v582
        %v584 = vsub.f32 %v457, %v493
        %v585 = vsub.f32 %v459, %v499
        %v586 = vsub.f32 %v461, %v505
        %v587 = vsub.f32 %v463, %v511
        %v588 = vsub.f32 %v465, %v517
        %v589 = vsub.f32 %v467, %v523
        %v590 = vsub.f32 %v469, %v529
        %v591 = vsub.f32 %v471, %v535
        %v592 = vsub.f32 %v473, %v541
        %v593 = vsub.f32 %v475, %v547
        %v594 = vsub.f32 %v477, %v553
        %v595 = vsub.f32 %v479, %v559
        %v596 = vsub.f32 %v481, %v565
        %v597 = vsub.f32 %v483, %v571
        %v598 = vsub.f32 %v485, %v577
        %v599 = vsub.f32 %v487, %v583
        %v600 = vmul.f32 %v584, 1.442695
        %v601 = vpow.pop %v600
        %v602 = vmul.f32 %v585, 1.442695
        %v603 = vpow.pop %v602
        %v604 = vmul.f32 %v586, 1.442695
        %v605 = vpow.pop %v604
        %v606 = vmul.f32 %v587, 1.442695
        %v607 = vpow.pop %v606
        %v608 = vmul.f32 %v588, 1.442695
        %v609 = vpow.pop %v608
        %v610 = vmul.f32 %v589, 1.442695
        %v611 = vpow.pop %v610
        %v612 = vmul.f32 %v590, 1.442695
        %v613 = vpow.pop %v612
        %v614 = vmul.f32 %v591, 1.442695
        %v615 = vpow.pop %v614
        %v616 = vmul.f32 %v592, 1.442695
        %v617 = vpow.pop %v616
        %v618 = vmul.f32 %v593, 1.442695
        %v619 = vpow.pop %v618
        %v620 = vmul.f32 %v594, 1.442695
        %v621 = vpow.pop %v620
        %v622 = vmul.f32 %v595, 1.442695
        %v623 = vpow.pop %v622
        %v624 = vmul.f32 %v596, 1.442695
        %v625 = vpow.pop %v624
        %v626 = vmul.f32 %v597, 1.442695
        %v627 = vpow.pop %v626
        %v628 = vmul.f32 %v598, 1.442695
        %v629 = vpow.pop %v628
        %v630 = vmul.f32 %v599, 1.442695
        %v631 = vpow.pop %v630
        %v632 = vmul.f32 %v601, %v233
        %v633 = vmul.f32 %v603, %v234
        %v634 = vmul.f32 %v605, %v235
        %v635 = vmul.f32 %v607, %v236
        %v636 = vmul.f32 %v609, %v237
        %v637 = vmul.f32 %v611, %v238
        %v638 = vmul.f32 %v613, %v239
        %v639 = vmul.f32 %v615, %v240
        %v640 = vmul.f32 %v617, %v241
        %v641 = vmul.f32 %v619, %v242
        %v642 = vmul.f32 %v621, %v243
        %v643 = vmul.f32 %v623, %v244
        %v644 = vmul.f32 %v625, %v245
        %v645 = vmul.f32 %v627, %v246
        %v646 = vmul.f32 %v629, %v247
        %v647 = vmul.f32 %v631, %v248
        %v648 = vrot.slane %v632, 4
        %v649 = vadd.f32 %v632, %v648
        %v650 = vrot.slane %v649, 2
        %v651 = vadd.f32 %v649, %v650
        %v652 = vrot.slane %v651, 1
        %v653 = vadd.f32 %v651, %v652
        %v654 = vrot.slane %v633, 4
        %v655 = vadd.f32 %v633, %v654
        %v656 = vrot.slane %v655, 2
        %v657 = vadd.f32 %v655, %v656
        %v658 = vrot.slane %v657, 1
        %v659 = vadd.f32 %v657, %v658
        %v660 = vrot.slane %v634, 4
        %v661 = vadd.f32 %v634, %v660
        %v662 = vrot.slane %v661, 2
        %v663 = vadd.f32 %v661, %v662
        %v664 = vrot.slane %v663, 1
        %v665 = vadd.f32 %v663, %v664
        %v666 = vrot.slane %v635, 4
        %v667 = vadd.f32 %v635, %v666
        %v668 = vrot.slane %v667, 2
        %v669 = vadd.f32 %v667, %v668
        %v670 = vrot.slane %v669, 1
        %v671 = vadd.f32 %v669, %v670
        %v672 = vrot.slane %v636, 4
        %v673 = vadd.f32 %v636, %v672
        %v674 = vrot.slane %v673, 2
        %v675 = vadd.f32 %v673, %v674
        %v676 = vrot.slane %v675, 1
        %v677 = vadd.f32 %v675, %v676
        %v678 = vrot.slane %v637, 4
        %v679 = vadd.f32 %v637, %v678
        %v680 = vrot.slane %v679, 2
        %v681 = vadd.f32 %v679, %v680
        %v682 = vrot.slane %v681, 1
        %v683 = vadd.f32 %v681, %v682
        %v684 = vrot.slane %v638, 4
        %v685 = vadd.f32 %v638, %v684
        %v686 = vrot.slane %v685, 2
        %v687 = vadd.f32 %v685, %v686
        %v688 = vrot.slane %v687, 1
        %v689 = vadd.f32 %v687, %v688
        %v690 = vrot.slane %v639, 4
        %v691 = vadd.f32 %v639, %v690
        %v692 = vrot.slane %v691, 2
        %v693 = vadd.f32 %v691, %v692
        %v694 = vrot.slane %v693, 1
        %v695 = vadd.f32 %v693, %v694
        %v696 = vrot.slane %v640, 4
        %v697 = vadd.f32 %v640, %v696
        %v698 = vrot.slane %v697, 2
        %v699 = vadd.f32 %v697, %v698
        %v700 = vrot.slane %v699, 1
        %v701 = vadd.f32 %v699, %v700
        %v702 = vrot.slane %v641, 4
        %v703 = vadd.f32 %v641, %v702
        %v704 = vrot.slane %v703, 2
        %v705 = vadd.f32 %v703, %v704
        %v706 = vrot.slane %v705, 1
        %v707 = vadd.f32 %v705, %v706
        %v708 = vrot.slane %v642, 4
        %v709 = vadd.f32 %v642, %v708
        %v710 = vrot.slane %v709, 2
        %v711 = vadd.f32 %v709, %v710
        %v712 = vrot.slane %v711, 1
        %v713 = vadd.f32 %v711, %v712
        %v714 = vrot.slane %v643, 4
        %v715 = vadd.f32 %v643, %v714
        %v716 = vrot.slane %v715, 2
        %v717 = vadd.f32 %v715, %v716
        %v718 = vrot.slane %v717, 1
        %v719 = vadd.f32 %v717, %v718
        %v720 = vrot.slane %v644, 4
        %v721 = vadd.f32 %v644, %v720
        %v722 = vrot.slane %v721, 2
        %v723 = vadd.f32 %v721, %v722
        %v724 = vrot.slane %v723, 1
        %v725 = vadd.f32 %v723, %v724
        %v726 = vrot.slane %v645, 4
        %v727 = vadd.f32 %v645, %v726
        %v728 = vrot.slane %v727, 2
        %v729 = vadd.f32 %v727, %v728
        %v730 = vrot.slane %v729, 1
        %v731 = vadd.f32 %v729, %v730
        %v732 = vrot.slane %v646, 4
        %v733 = vadd.f32 %v646, %v732
        %v734 = vrot.slane %v733, 2
        %v735 = vadd.f32 %v733, %v734
        %v736 = vrot.slane %v735, 1
        %v737 = vadd.f32 %v735, %v736
        %v738 = vrot.slane %v647, 4
        %v739 = vadd.f32 %v647, %v738
        %v740 = vrot.slane %v739, 2
        %v741 = vadd.f32 %v739, %v740
        %v742 = vrot.slane %v741, 1
        %v743 = vadd.f32 %v741, %v742
        %v744 = vrot.slane %v601, 4
        %v745 = vadd.f32 %v601, %v744
        %v746 = vrot.slane %v745, 2
        %v747 = vadd.f32 %v745, %v746
        %v748 = vrot.slane %v747, 1
        %v749 = vadd.f32 %v747, %v748
        %v750 = vrot.slane %v603, 4
        %v751 = vadd.f32 %v603, %v750
        %v752 = vrot.slane %v751, 2
        %v753 = vadd.f32 %v751, %v752
        %v754 = vrot.slane %v753, 1
        %v755 = vadd.f32 %v753, %v754
        %v756 = vrot.slane %v605, 4
        %v757 = vadd.f32 %v605, %v756
        %v758 = vrot.slane %v757, 2
        %v759 = vadd.f32 %v757, %v758
        %v760 = vrot.slane %v759, 1
        %v761 = vadd.f32 %v759, %v760
        %v762 = vrot.slane %v607, 4
        %v763 = vadd.f32 %v607, %v762
        %v764 = vrot.slane %v763, 2
        %v765 = vadd.f32 %v763, %v764
        %v766 = vrot.slane %v765, 1
        %v767 = vadd.f32 %v765, %v766
        %v768 = vrot.slane %v609, 4
        %v769 = vadd.f32 %v609, %v768
        %v770 = vrot.slane %v769, 2
        %v771 = vadd.f32 %v769, %v770
        %v772 = vrot.slane %v771, 1
        %v773 = vadd.f32 %v771, %v772
        %v774 = vrot.slane %v611, 4
        %v775 = vadd.f32 %v611, %v774
        %v776 = vrot.slane %v775, 2
        %v777 = vadd.f32 %v775, %v776
        %v778 = vrot.slane %v777, 1
        %v779 = vadd.f32 %v777, %v778
        %v780 = vrot.slane %v613, 4
        %v781 = vadd.f32 %v613, %v780
        %v782 = vrot.slane %v781, 2
        %v783 = vadd.f32 %v781, %v782
        %v784 = vrot.slane %v783, 1
        %v785 = vadd.f32 %v783, %v784
        %v786 = vrot.slane %v615, 4
        %v787 = vadd.f32 %v615, %v786
        %v788 = vrot.slane %v787, 2
        %v789 = vadd.f32 %v787, %v788
        %v790 = vrot.slane %v789, 1
        %v791 = vadd.f32 %v789, %v790
        %v792 = vrot.slane %v617, 4
        %v793 = vadd.f32 %v617, %v792
        %v794 = vrot.slane %v793, 2
        %v795 = vadd.f32 %v793, %v794
        %v796 = vrot.slane %v795, 1
        %v797 = vadd.f32 %v795, %v796
        %v798 = vrot.slane %v619, 4
        %v799 = vadd.f32 %v619, %v798
        %v800 = vrot.slane %v799, 2
        %v801 = vadd.f32 %v799, %v800
        %v802 = vrot.slane %v801, 1
        %v803 = vadd.f32 %v801, %v802
        %v804 = vrot.slane %v621, 4
        %v805 = vadd.f32 %v621, %v804
        %v806 = vrot.slane %v805, 2
        %v807 = vadd.f32 %v805, %v806
        %v808 = vrot.slane %v807, 1
        %v809 = vadd.f32 %v807, %v808
        %v810 = vrot.slane %v623, 4
        %v811 = vadd.f32 %v623, %v810
        %v812 = vrot.slane %v811, 2
        %v813 = vadd.f32 %v811, %v812
        %v814 = vrot.slane %v813, 1
        %v815 = vadd.f32 %v813, %v814
        %v816 = vrot.slane %v625, 4
        %v817 = vadd.f32 %v625, %v816
        %v818 = vrot.slane %v817, 2
        %v819 = vadd.f32 %v817, %v818
        %v820 = vrot.slane %v819, 1
        %v821 = vadd.f32 %v819, %v820
        %v822 = vrot.slane %v627, 4
        %v823 = vadd.f32 %v627, %v822
        %v824 = vrot.slane %v823, 2
        %v825 = vadd.f32 %v823, %v824
        %v826 = vrot.slane %v825, 1
        %v827 = vadd.f32 %v825, %v826
        %v828 = vrot.slane %v629, 4
        %v829 = vadd.f32 %v629, %v828
        %v830 = vrot.slane %v829, 2
        %v831 = vadd.f32 %v829, %v830
        %v832 = vrot.slane %v831, 1
        %v833 = vadd.f32 %v831, %v832
        %v834 = vrot.slane %v631, 4
        %v835 = vadd.f32 %v631, %v834
        %v836 = vrot.slane %v835, 2
        %v837 = vadd.f32 %v835, %v836
        %v838 = vrot.slane %v837, 1
        %v839 = vadd.f32 %v837, %v838
        %v840 = vrcp.pop %v749
        %v841 = vrcp.pop %v755
        %v842 = vrcp.pop %v761
        %v843 = vrcp.pop %v767
        %v844 = vrcp.pop %v773
        %v845 = vrcp.pop %v779
        %v846 = vrcp.pop %v785
        %v847 = vrcp.pop %v791
        %v848 = vrcp.pop %v797
        %v849 = vrcp.pop %v803
        %v850 = vrcp.pop %v809
        %v851 = vrcp.pop %v815
        %v852 = vrcp.pop %v821
        %v853 = vrcp.pop %v827
        %v854 = vrcp.pop %v833
        %v855 = vrcp.pop %v839
        %v856 = vmul.f32 %v653, %v840
        %v857 = vmul.f32 %v659, %v841
        %v858 = vmul.f32 %v665, %v842
        %v859 = vmul.f32 %v671, %v843
        %v860 = vmul.f32 %v677, %v844
        %v861 = vmul.f32 %v683, %v845
        %v862 = vmul.f32 %v689, %v846
        %v863 = vmul.f32 %v695, %v847
        %v864 = vmul.f32 %v701, %v848
        %v865 = vmul.f32 %v707, %v849
        %v866 = vmul.f32 %v713, %v850
        %v867 = vmul.f32 %v719, %v851
        %v868 = vmul.f32 %v725, %v852
        %v869 = vmul.f32 %v731, %v853
        %v870 = vmul.f32 %v737, %v854
        %v871 = vmul.f32 %v743, %v855
        %vm888 = vcmask 1041409
        %v889 = vsel %vm888, %v857, %v856
        %vm890 = vcmask 1042434
        %v891 = vsel %vm890, %v858, %v889
        %vm892 = vcmask 1043459
        %v893 = vsel %vm892, %v859, %v891
        %vm894 = vcmask 1044484
        %v895 = vsel %vm894, %v860, %v893
        %vm896 = vcmask 1045509
        %v897 = vsel %vm896, %v861, %v895
        %vm898 = vcmask 1046534
        %v899 = vsel %vm898, %v862, %v897
        %vm900 = vcmask 1047559
        %v901 = vsel %vm900, %v863, %v899
        %v902 = vsel %vm888, %v865, %v864
        %v903 = vsel %vm890, %v866, %v902
        %v904 = vsel %vm892, %v867, %v903
        %v905 = vsel %vm894, %v868, %v904
        %v906 = vsel %vm896, %v869, %v905
        %v907 = vsel %vm898, %v870, %v906
        %v908 = vsel %vm900, %v871, %v907
        %911 = vst [vmem:[%s230] sm:$0xff] %v901
        %912 = vst [vmem:[%s230 + $0x8] sm:$0xff] %v908
        %s913 = sand.u32 %s119, 1
        %s914 = scalar_lea.sflag [#allocation4], %s913
        %s915 = sand.u32 %s119, 1
        %s916 = smul.addr %s915, 16
        %s917 = scalar_lea.vmem [#allocation7], %s916
        // Predicated region
        $region45: #{tpu_custom_call.1} parent=35 // pred_check
          %p918 = pneg %p129
        $region46: #{tpu_custom_call.1} parent=35 // pred_check_branch
          %920 = sbr.rel (%p918) target = $region48
        $region47: #{tpu_custom_call.1} parent=35 // pred_region
          %s921 = smul.u32 2, %s22
          %s923 = ssub.s32 256, 256
          %924 = vsyncadd %s914, %s923
          %s925 = smul.addr %s921, 128
          %s926 = scalar_lea.hbm %s4, %s925
          %s927 = sshll.u32 %s917, 4
          %s928 = int_to_ptr.vmem [resolvable:$true] %s927
          %933 = dma.vmem_to_hbm [thread:$0]  %s928, 256, %s926, %s914, 128, 128, 8
        $region48: #{tpu_custom_call.1} parent=35 // pred_fallthru
          _
      $region36: #{tpu_custom_call.1} parent=5 // pred_fallthru
        _
      %p934 = scmp.le.s32.totalorder 2, %s17
      // Predicated region
      $region49: #{tpu_custom_call.1} parent=5 // pred_check
        %p935 = pneg %p934
      $region50: #{tpu_custom_call.1} parent=5 // pred_check_branch
        %937 = sbr.rel (%p935) target = $region52
      $region51: #{tpu_custom_call.1} parent=5 // pred_region
        %s938 = ssub.s32 %s17, 2
        // Predicated region
        $region53: #{tpu_custom_call.1} parent=51 // pred_check
          %p939 = pneg %p135
        $region54: #{tpu_custom_call.1} parent=51 // pred_check_branch
          %941 = sbr.rel (%p939) target = $region56
        $region55: #{tpu_custom_call.1} parent=51 // pred_region
          %s942 = sand.u32 %s120, 1
          %s943 = scalar_lea.sflag [#allocation4], %s942
          %s944 = sand.u32 %s120, 1
          %s945 = smul.addr %s944, 16
          %s946 = scalar_lea.vmem [#allocation7], %s945
          %947 = dma.done %s943, 256
        $region56: #{tpu_custom_call.1} parent=51 // pred_fallthru
          _
      $region52: #{tpu_custom_call.1} parent=5 // pred_fallthru
        _
    $region6: #{tpu_custom_call.1} parent=1 // loop_footer
      %s21 = sadd.s32 1, %s17
    $region7: #{tpu_custom_call.1} parent=1 // loop_footer_branch
      %16 = sbr.rel target = $region3
    $region8: #{tpu_custom_call.1} parent=1 // loop_exit
      _
    %948 = vsyncpa [#allocation3], 1
    %s949 = scalar_lea.sflag [#allocation3], 1
    %950 = vsyncpa %s949, 1
    %951 = vsyncpa [#allocation6], 1
    %952 = vsyncpa [#allocation4], 1
    %s953 = scalar_lea.sflag [#allocation4], 1
    %954 = vsyncpa %s953, 1

// kernel: tpu_custom_call.1
$region0: #{tpu_custom_call.1}
  #allocation0 [shape = 'u32[]', space=smem, size = 0x4, offset = 0x4, fixed_abs, tag = 'smem constant byte address 0x4 - core index']
  #allocation1 [shape = 'u32[144,128]{1,0:T(1,128)}', space=vmem, size = 0x12000, scoped, tag = 'internal scratch']
  %s0 = inlined_call_operand.hbm [shape: f32[32,8,128], index: 0, kind: input, shape index: {}]
  %s1 = inlined_call_operand.hbm [shape: f32[128,128], index: 1, kind: input, shape index: {}]
  %s2 = inlined_call_operand.vmem [shape: f32[1,128], index: 2, kind: input, shape index: {}]
  %s3 = inlined_call_operand.vmem [shape: f32[1,128], index: 3, kind: input, shape index: {}]
  %s4 = inlined_call_operand.hbm [shape: f32[32,128], index: 4, kind: output, shape index: {}]
  %s5 = sld [smem:[#allocation0]]
  $region57: #{tpu_custom_call.1} parent=0
    _
  %s7 = ssub.s32 1, %s5
  %s8 = scalar_select 0, %s7, %s5
  $region1: #{tpu_custom_call.1} parent=0
    #allocation2 [shape = 'u8[131072]{0}', space=vmem, size = 0x20000, scoped, tag = 'input window, operand 0']
    #allocation3 [shape = 's32[2]{0}', space=sflag, size = 0x8, scoped, tag = 'scoped memory for tpu_custom_call.1']
    #allocation4 [shape = 's32[2]{0}', space=sflag, size = 0x8, scoped, tag = 'scoped memory for tpu_custom_call.1']
    #allocation5 [shape = 'u8[65536]{0}', space=vmem, size = 0x10000, scoped, tag = 'input window, operand 1, single buffered']
    #allocation6 [shape = 's32[1]{0}', space=sflag, size = 0x4, scoped, tag = 'scoped memory for tpu_custom_call.1']
    #allocation7 [shape = 'u8[16384]{0}', space=vmem, size = 0x4000, scoped, tag = 'output window, operand 0']
    %9 = vsyncpa [#allocation3], 0
    %s10 = scalar_lea.sflag [#allocation3], 1
    %11 = vsyncpa %s10, 0
    %12 = vsyncpa [#allocation6], 0
    %13 = vsyncpa [#allocation4], 0
    %s14 = scalar_lea.sflag [#allocation4], 1
    %15 = vsyncpa %s14, 0
    loop: start=0, step=1, limit=4
    $region2: #{tpu_custom_call.1} parent=1 // loop_pre_header
      _
    $region3: #{tpu_custom_call.1} parent=1 // loop_header
      %s17 = sphi 0, %s21
      %p18 = scmp.ge.s32.totalorder %s17, 4
      %s27 = sphi 0, %s29
      %s30 = sphi 0, %s27
      %s31 = sphi 0, %s30
      %s47 = sphi 0, %s31
      %s51 = sphi 0, %s51
      %s53 = sphi 0, %s51
      %s54 = sphi 0, %s53
      %s68 = sphi 0, %s54
      %s72 = sphi 0, %s72
      %s74 = sphi 0, %s72
      %s75 = sphi 0, %s74
      %s89 = sphi 0, %s75
      %s93 = sphi 0, %s93
      %s95 = sphi 0, %s93
      %s96 = sphi 0, %s95
      %s110 = sphi 0, %s96
      %s116 = sphi 0, %s118
      %s119 = sphi 0, %s116
      %s120 = sphi 0, %s119
      %s136 = sphi 0, %s120
    $region4: #{tpu_custom_call.1} parent=1 // loop_header_branch
      %20 = sbr.rel (%p18) target = $region8
    $region5: #{tpu_custom_call.1} parent=1 // loop_body
      %s22 = ssub.s32 %s17, 1
      %s23 = ssub.s32 %s17, 2
      %s24 = sadd.s32 %s17, 1
      %s25 = ssub.s32 %s17, %s24
      %p26 = scmp.eq.s32.totalorder %s25, 0
      %s28 = sadd.s32 %s27, 1
      %s29 = scalar_select %p26, %s27, %s28
      %p32 = pneg %p26
      %p33 = scmp.eq.s32.totalorder %s17, 1
      %p34 = por %p32, %p33
      %p35 = scmp.ne.s32.totalorder %s27, %s30
      %p36 = scmp.eq.s32.totalorder %s17, 0
      %p37 = por %p35, %p36
      %p38 = scmp.ne.s32.totalorder %s27, %s30
      %p39 = scmp.eq.s32.totalorder %s22, 1
      %p40 = por %p38, %p39
      %p41 = scmp.ne.s32.totalorder %s30, %s31
      %p42 = scmp.eq.s32.totalorder %s22, 0
      %p43 = por %p41, %p42
      %p44 = scmp.ne.s32.totalorder %s30, %s31
      %p45 = scmp.eq.s32.totalorder %s23, 1
      %p46 = por %p44, %p45
      %p48 = scmp.ne.s32.totalorder %s31, %s47
      %p49 = scmp.eq.s32.totalorder %s23, 0
      %p50 = por %p48, %p49
      %s52 = sadd.s32 %s51, 1
      %p55 = scmp.eq.s32.totalorder %s17, 1
      %p56 = scmp.ne.s32.totalorder %s51, %s53
      %p57 = scmp.eq.s32.totalorder %s17, 0
      %p58 = por %p56, %p57
      %p59 = scmp.ne.s32.totalorder %s51, %s53
      %p60 = scmp.eq.s32.totalorder %s22, 1
      %p61 = por %p59, %p60
      %p62 = scmp.ne.s32.totalorder %s53, %s54
      %p63 = scmp.eq.s32.totalorder %s22, 0
      %p64 = por %p62, %p63
      %p65 = scmp.ne.s32.totalorder %s53, %s54
      %p66 = scmp.eq.s32.totalorder %s23, 1
      %p67 = por %p65, %p66
      %p69 = scmp.ne.s32.totalorder %s54, %s68
      %p70 = scmp.eq.s32.totalorder %s23, 0
      %p71 = por %p69, %p70
      %s73 = sadd.s32 %s72, 1
      %p76 = scmp.eq.s32.totalorder %s17, 1
      %p77 = scmp.ne.s32.totalorder %s72, %s74
      %p78 = scmp.eq.s32.totalorder %s17, 0
      %p79 = por %p77, %p78
      %p80 = scmp.ne.s32.totalorder %s72, %s74
      %p81 = scmp.eq.s32.totalorder %s22, 1
      %p82 = por %p80, %p81
      %p83 = scmp.ne.s32.totalorder %s74, %s75
      %p84 = scmp.eq.s32.totalorder %s22, 0
      %p85 = por %p83, %p84
      %p86 = scmp.ne.s32.totalorder %s74, %s75
      %p87 = scmp.eq.s32.totalorder %s23, 1
      %p88 = por %p86, %p87
      %p90 = scmp.ne.s32.totalorder %s75, %s89
      %p91 = scmp.eq.s32.totalorder %s23, 0
      %p92 = por %p90, %p91
      %s94 = sadd.s32 %s93, 1
      %p97 = scmp.eq.s32.totalorder %s17, 1
      %p98 = scmp.ne.s32.totalorder %s93, %s95
      %p99 = scmp.eq.s32.totalorder %s17, 0
      %p100 = por %p98, %p99
      %p101 = scmp.ne.s32.totalorder %s93, %s95
      %p102 = scmp.eq.s32.totalorder %s22, 1
      %p103 = por %p101, %p102
      %p104 = scmp.ne.s32.totalorder %s95, %s96
      %p105 = scmp.eq.s32.totalorder %s22, 0
      %p106 = por %p104, %p105
      %p107 = scmp.ne.s32.totalorder %s95, %s96
      %p108 = scmp.eq.s32.totalorder %s23, 1
      %p109 = por %p107, %p108
      %p111 = scmp.ne.s32.totalorder %s96, %s110
      %p112 = scmp.eq.s32.totalorder %s23, 0
      %p113 = por %p111, %p112
      %s114 = ssub.s32 %s17, %s24
      %p115 = scmp.eq.s32.totalorder %s114, 0
      %s117 = sadd.s32 %s116, 1
      %s118 = scalar_select %p115, %s116, %s117
      %p121 = pneg %p115
      %p122 = scmp.eq.s32.totalorder %s17, 1
      %p123 = por %p121, %p122
      %p124 = scmp.ne.s32.totalorder %s116, %s119
      %p125 = scmp.eq.s32.totalorder %s17, 0
      %p126 = por %p124, %p125
      %p127 = scmp.ne.s32.totalorder %s116, %s119
      %p128 = scmp.eq.s32.totalorder %s22, 1
      %p129 = por %p127, %p128
      %p130 = scmp.ne.s32.totalorder %s119, %s120
      %p131 = scmp.eq.s32.totalorder %s22, 0
      %p132 = por %p130, %p131
      %p133 = scmp.ne.s32.totalorder %s119, %s120
      %p134 = scmp.eq.s32.totalorder %s23, 1
      %p135 = por %p133, %p134
      %p137 = scmp.ne.s32.totalorder %s120, %s136
      %p138 = scmp.eq.s32.totalorder %s23, 0
      %p139 = por %p137, %p138
      %p140 = scmp.le.s32.totalorder 1, %s17
      %p141 = scmp.lt.s32.totalorder %s17, 3
      %p142 = pnand %p140, %p141
      %p143 = pneg %p142
      // Predicated region
      $region9: #{tpu_custom_call.1} parent=5 // pred_check
        _
      $region10: #{tpu_custom_call.1} parent=5 // pred_check_branch
        %145 = sbr.rel (%p142) target = $region12
      $region11: #{tpu_custom_call.1} parent=5 // pred_region
        %s146 = ssub.s32 %s17, 1
        // Predicated region
        $region13: #{tpu_custom_call.1} parent=11 // pred_check
          %p147 = pneg %p64
        $region14: #{tpu_custom_call.1} parent=11 // pred_check_branch
          %149 = sbr.rel (%p147) target = $region16
        $region15: #{tpu_custom_call.1} parent=11 // pred_region
          %s151 = ssub.s32 2048, 2048
          %152 = vsyncadd [#allocation6], %s151
          %s153 = sshll.u32 [#allocation5], 4
          %s154 = int_to_ptr.vmem [resolvable:$true] %s153
          %159 = dma.hbm_to_vmem [thread:$0]  %s1, 2048, %s154, [#allocation6], 128, 128, 8
        $region16: #{tpu_custom_call.1} parent=11 // pred_fallthru
          _
        // Predicated region
        $region17: #{tpu_custom_call.1} parent=11 // pred_check
          %p160 = pneg %p85
        $region18: #{tpu_custom_call.1} parent=11 // pred_check_branch
          %162 = sbr.rel (%p160) target = $region20
        $region19: #{tpu_custom_call.1} parent=11 // pred_region
          _
        $region20: #{tpu_custom_call.1} parent=11 // pred_fallthru
          _
        // Predicated region
        $region21: #{tpu_custom_call.1} parent=11 // pred_check
          %p163 = pneg %p106
        $region22: #{tpu_custom_call.1} parent=11 // pred_check_branch
          %165 = sbr.rel (%p163) target = $region24
        $region23: #{tpu_custom_call.1} parent=11 // pred_region
          _
        $region24: #{tpu_custom_call.1} parent=11 // pred_fallthru
          _
      $region12: #{tpu_custom_call.1} parent=5 // pred_fallthru
        _
      %p166 = scmp.lt.s32.totalorder %s17, 2
      // Predicated region
      $region25: #{tpu_custom_call.1} parent=5 // pred_check
        %p167 = pneg %p166
      $region26: #{tpu_custom_call.1} parent=5 // pred_check_branch
        %169 = sbr.rel (%p167) target = $region28
      $region27: #{tpu_custom_call.1} parent=5 // pred_region
        // Predicated region
        $region29: #{tpu_custom_call.1} parent=27 // pred_check
          %p170 = pneg %p37
        $region30: #{tpu_custom_call.1} parent=27 // pred_check_branch
          %172 = sbr.rel (%p170) target = $region32
        $region31: #{tpu_custom_call.1} parent=27 // pred_region
          %s173 = sand.u32 %s27, 1
          %s174 = scalar_lea.sflag [#allocation3], %s173
          %s175 = sand.u32 %s27, 1
          %s176 = smul.addr %s175, 128
          %s177 = scalar_lea.vmem [#allocation2], %s176
          %s178 = smul.u32 16, %s17
          %s180 = ssub.s32 2048, 2048
          %181 = vsyncadd %s174, %s180
          %s182 = smul.addr %s178, 128
          %s183 = scalar_lea.hbm %s0, %s182
          %s184 = sshll.u32 %s177, 4
          %s185 = int_to_ptr.vmem [resolvable:$true] %s184
          %190 = dma.hbm_to_vmem [thread:$0]  %s183, 2048, %s185, %s174, 128, 128, 8
        $region32: #{tpu_custom_call.1} parent=27 // pred_fallthru
          _
      $region28: #{tpu_custom_call.1} parent=5 // pred_fallthru
        _
      %p191 = scmp.le.s32.totalorder 1, %s17
      %p192 = scmp.lt.s32.totalorder %s17, 3
      %p193 = pnand %p191, %p192
      %p194 = pneg %p193
      // Predicated region
      $region33: #{tpu_custom_call.1} parent=5 // pred_check
        _
      $region34: #{tpu_custom_call.1} parent=5 // pred_check_branch
        %196 = sbr.rel (%p193) target = $region36
      $region35: #{tpu_custom_call.1} parent=5 // pred_region
        %s197 = ssub.s32 %s17, 1
        %s198 = sand.u32 %s30, 1
        %s199 = scalar_lea.sflag [#allocation3], %s198
        %s200 = sand.u32 %s30, 1
        %s201 = smul.addr %s200, 128
        %s202 = scalar_lea.vmem [#allocation2], %s201
        // Predicated region
        $region37: #{tpu_custom_call.1} parent=35 // pred_check
          %p203 = pneg %p43
        $region38: #{tpu_custom_call.1} parent=35 // pred_check_branch
          %205 = sbr.rel (%p203) target = $region40
        $region39: #{tpu_custom_call.1} parent=35 // pred_region
          %206 = dma.done %s199, 2048
        $region40: #{tpu_custom_call.1} parent=35 // pred_fallthru
          _
        // Predicated region
        $region41: #{tpu_custom_call.1} parent=35 // pred_check
          %p207 = pneg %p64
        $region42: #{tpu_custom_call.1} parent=35 // pred_check_branch
          %209 = sbr.rel (%p207) target = $region44
        $region43: #{tpu_custom_call.1} parent=35 // pred_region
          %210 = dma.done [#allocation6], 2048
        $region44: #{tpu_custom_call.1} parent=35 // pred_fallthru
          _
        %s211 = sand.u32 %s30, 1
        %s212 = scalar_lea.sflag [#allocation3], %s211
        %s213 = sand.u32 %s30, 1
        %s214 = smul.addr %s213, 128
        %s215 = scalar_lea.vmem [#allocation2], %s214
        %p216 = pneg %p43
        %p217 = pneg %p40
        %p218 = pneg %p64
        %p219 = pneg %p61
        %p220 = pneg %p85
        %p221 = pneg %p82
        %p222 = pneg %p106
        %p223 = pneg %p103
        %p224 = pneg %p132
        %p225 = pneg %p129
        %s226 = sand.u32 %s119, 1
        %s227 = scalar_lea.sflag [#allocation4], %s226
        %s228 = sand.u32 %s119, 1
        %s229 = smul.addr %s228, 16
        %s230 = scalar_lea.vmem [#allocation7], %s229
        %s231 = smul.u32 16, %s22
        %s232 = smul.u32 2, %s22
        %v233 = vld [vmem:[%s202] sm:$0xff]
        %v234 = vld [vmem:[%s202 + $0x8] sm:$0xff]
        %v235 = vld [vmem:[%s202 + $0x10] sm:$0xff]
        %v236 = vld [vmem:[%s202 + $0x18] sm:$0xff]
        %v237 = vld [vmem:[%s202 + $0x20] sm:$0xff]
        %v238 = vld [vmem:[%s202 + $0x28] sm:$0xff]
        %v239 = vld [vmem:[%s202 + $0x30] sm:$0xff]
        %v240 = vld [vmem:[%s202 + $0x38] sm:$0xff]
        %v241 = vld [vmem:[%s202 + $0x40] sm:$0xff]
        %v242 = vld [vmem:[%s202 + $0x48] sm:$0xff]
        %v243 = vld [vmem:[%s202 + $0x50] sm:$0xff]
        %v244 = vld [vmem:[%s202 + $0x58] sm:$0xff]
        %v245 = vld [vmem:[%s202 + $0x60] sm:$0xff]
        %v246 = vld [vmem:[%s202 + $0x68] sm:$0xff]
        %v247 = vld [vmem:[%s202 + $0x70] sm:$0xff]
        %v248 = vld [vmem:[%s202 + $0x78] sm:$0xff]
        %v249 = vld [vmem:[#allocation5] sm:$0xff]
        %v250 = vld [vmem:[#allocation5 + $0x8] sm:$0xff]
        %v251 = vld [vmem:[#allocation5 + $0x10] sm:$0xff]
        %v252 = vld [vmem:[#allocation5 + $0x18] sm:$0xff]
        %v253 = vld [vmem:[#allocation5 + $0x20] sm:$0xff]
        %v254 = vld [vmem:[#allocation5 + $0x28] sm:$0xff]
        %v255 = vld [vmem:[#allocation5 + $0x30] sm:$0xff]
        %v256 = vld [vmem:[#allocation5 + $0x38] sm:$0xff]
        %v257 = vld [vmem:[#allocation5 + $0x40] sm:$0xff]
        %v258 = vld [vmem:[#allocation5 + $0x48] sm:$0xff]
        %v259 = vld [vmem:[#allocation5 + $0x50] sm:$0xff]
        %v260 = vld [vmem:[#allocation5 + $0x58] sm:$0xff]
        %v261 = vld [vmem:[#allocation5 + $0x60] sm:$0xff]
        %v262 = vld [vmem:[#allocation5 + $0x68] sm:$0xff]
        %v263 = vld [vmem:[#allocation5 + $0x70] sm:$0xff]
        %v264 = vld [vmem:[#allocation5 + $0x78] sm:$0xff]
        %v265 = vld [vmem:[%s2] sm:$0x1]
        %v267 = vlaneseq
        %v268 = vshrl.u32 %v267, 7
        %v269 = vsub.s32 0, %v268
        %v270 = vrot.slane %v265, %v269
        %272 = vmatprep.subr.mxu0 0.0
        %273 = vmatpush1.msra.mxu0 %v264
        %274 = vmatprep.subr.mxu0 0.0
        %275 = vmatpush1.msra.mxu0 %v263
        %276 = vmatprep.subr.mxu0 0.0
        %277 = vmatpush1.msra.mxu0 %v262
        %278 = vmatprep.subr.mxu0 0.0
        %279 = vmatpush1.msra.mxu0 %v261
        %280 = vmatprep.subr.mxu0 0.0
        %281 = vmatpush1.msra.mxu0 %v260
        %282 = vmatprep.subr.mxu0 0.0
        %283 = vmatpush1.msra.mxu0 %v259
        %284 = vmatprep.subr.mxu0 0.0
        %285 = vmatpush1.msra.mxu0 %v258
        %286 = vmatprep.subr.mxu0 0.0
        %287 = vmatpush1.msra.mxu0 %v257
        %288 = vmatprep.subr.mxu0 0.0
        %289 = vmatpush1.msra.mxu0 %v256
        %290 = vmatprep.subr.mxu0 0.0
        %291 = vmatpush1.msra.mxu0 %v255
        %292 = vmatprep.subr.mxu0 0.0
        %293 = vmatpush1.msra.mxu0 %v254
        %294 = vmatprep.subr.mxu0 0.0
        %295 = vmatpush1.msra.mxu0 %v253
        %296 = vmatprep.subr.mxu0 0.0
        %297 = vmatpush1.msra.mxu0 %v252
        %298 = vmatprep.subr.mxu0 0.0
        %299 = vmatpush1.msra.mxu0 %v251
        %300 = vmatprep.subr.mxu0 0.0
        %301 = vmatpush1.msra.mxu0 %v250
        %302 = vmatprep.subr.mxu0 0.0
        %303 = vmatpush1.msra.mxu0 %v249
        %304 = vmatprep.subr.mxu0 0.0
        %305 = vmatpush2.msra.mxu0 0.0
        %306 = vmatprep.subr.mxu0 0.0
        %307 = vmatpush2.msra.mxu0 0.0
        %308 = vmatprep.subr.mxu0 0.0
        %309 = vmatpush2.msra.mxu0 0.0
        %310 = vmatprep.subr.mxu0 0.0
        %311 = vmatpush2.msra.mxu0 0.0
        %312 = vmatprep.subr.mxu0 0.0
        %313 = vmatpush2.msra.mxu0 0.0
        %314 = vmatprep.subr.mxu0 0.0
        %315 = vmatpush2.msra.mxu0 0.0
        %316 = vmatprep.subr.mxu0 0.0
        %317 = vmatpush2.msra.mxu0 0.0
        %318 = vmatprep.subr.mxu0 0.0
        %319 = vmatpush2.msra.mxu0 0.0
        %320 = vmatprep.subr.mxu0 0.0
        %321 = vmatpush2.msra.mxu0 0.0
        %322 = vmatprep.subr.mxu0 0.0
        %323 = vmatpush2.msra.mxu0 0.0
        %324 = vmatprep.subr.mxu0 0.0
        %325 = vmatpush2.msra.mxu0 0.0
        %326 = vmatprep.subr.mxu0 0.0
        %327 = vmatpush2.msra.mxu0 0.0
        %328 = vmatprep.subr.mxu0 0.0
        %329 = vmatpush2.msra.mxu0 0.0
        %330 = vmatprep.subr.mxu0 0.0
        %331 = vmatpush2.msra.mxu0 0.0
        %332 = vmatprep.subr.mxu0 0.0
        %333 = vmatpush2.msra.mxu0 0.0
        %334 = vmatprep.subr.mxu0 0.0
        %335 = vmatpush2.msra.mxu0 0.0
        %336 = vmatprep.mubr.f32.mxu0 0.0
        %337 = vmatmul.mubr.f32.gmra.mxu0 %v233
        %v338 = vpop.f32.mrf.mxu0
        %v339 = vadd.f32 %v270, %v338
        %v340 = vpop.f32.mrf.mxu0
        %341 = vmatprep.mubr.f32.mxu0 0.0
        %342 = vmatmul.mubr.f32.gmra.mxu0 %v234
        %v343 = vpop.f32.mrf.mxu0
        %v344 = vadd.f32 %v270, %v343
        %v345 = vpop.f32.mrf.mxu0
        %346 = vmatprep.mubr.f32.mxu0 0.0
        %347 = vmatmul.mubr.f32.gmra.mxu0 %v235
        %v348 = vpop.f32.mrf.mxu0
        %v349 = vadd.f32 %v270, %v348
        %v350 = vpop.f32.mrf.mxu0
        %351 = vmatprep.mubr.f32.mxu0 0.0
        %352 = vmatmul.mubr.f32.gmra.mxu0 %v236
        %v353 = vpop.f32.mrf.mxu0
        %v354 = vadd.f32 %v270, %v353
        %v355 = vpop.f32.mrf.mxu0
        %356 = vmatprep.mubr.f32.mxu0 0.0
        %357 = vmatmul.mubr.f32.gmra.mxu0 %v237
        %v358 = vpop.f32.mrf.mxu0
        %v359 = vadd.f32 %v270, %v358
        %v360 = vpop.f32.mrf.mxu0
        %361 = vmatprep.mubr.f32.mxu0 0.0
        %362 = vmatmul.mubr.f32.gmra.mxu0 %v238
        %v363 = vpop.f32.mrf.mxu0
        %v364 = vadd.f32 %v270, %v363
        %v365 = vpop.f32.mrf.mxu0
        %366 = vmatprep.mubr.f32.mxu0 0.0
        %367 = vmatmul.mubr.f32.gmra.mxu0 %v239
        %v368 = vpop.f32.mrf.mxu0
        %v369 = vadd.f32 %v270, %v368
        %v370 = vpop.f32.mrf.mxu0
        %371 = vmatprep.mubr.f32.mxu0 0.0
        %372 = vmatmul.mubr.f32.gmra.mxu0 %v240
        %v373 = vpop.f32.mrf.mxu0
        %v374 = vadd.f32 %v270, %v373
        %v375 = vpop.f32.mrf.mxu0
        %376 = vmatprep.mubr.f32.mxu0 0.0
        %377 = vmatmul.mubr.f32.gmra.mxu0 %v241
        %v378 = vpop.f32.mrf.mxu0
        %v379 = vadd.f32 %v270, %v378
        %v380 = vpop.f32.mrf.mxu0
        %381 = vmatprep.mubr.f32.mxu0 0.0
        %382 = vmatmul.mubr.f32.gmra.mxu0 %v242
        %v383 = vpop.f32.mrf.mxu0
        %v384 = vadd.f32 %v270, %v383
        %v385 = vpop.f32.mrf.mxu0
        %386 = vmatprep.mubr.f32.mxu0 0.0
        %387 = vmatmul.mubr.f32.gmra.mxu0 %v243
        %v388 = vpop.f32.mrf.mxu0
        %v389 = vadd.f32 %v270, %v388
        %v390 = vpop.f32.mrf.mxu0
        %391 = vmatprep.mubr.f32.mxu0 0.0
        %392 = vmatmul.mubr.f32.gmra.mxu0 %v244
        %v393 = vpop.f32.mrf.mxu0
        %v394 = vadd.f32 %v270, %v393
        %v395 = vpop.f32.mrf.mxu0
        %396 = vmatprep.mubr.f32.mxu0 0.0
        %397 = vmatmul.mubr.f32.gmra.mxu0 %v245
        %v398 = vpop.f32.mrf.mxu0
        %v399 = vadd.f32 %v270, %v398
        %v400 = vpop.f32.mrf.mxu0
        %401 = vmatprep.mubr.f32.mxu0 0.0
        %402 = vmatmul.mubr.f32.gmra.mxu0 %v246
        %v403 = vpop.f32.mrf.mxu0
        %v404 = vadd.f32 %v270, %v403
        %v405 = vpop.f32.mrf.mxu0
        %406 = vmatprep.mubr.f32.mxu0 0.0
        %407 = vmatmul.mubr.f32.gmra.mxu0 %v247
        %v408 = vpop.f32.mrf.mxu0
        %v409 = vadd.f32 %v270, %v408
        %v410 = vpop.f32.mrf.mxu0
        %411 = vmatprep.mubr.f32.mxu0 0.0
        %412 = vmatmul.mubr.f32.gmra.mxu0 %v248
        %v413 = vpop.f32.mrf.mxu0
        %v414 = vadd.f32 %v270, %v413
        %v415 = vpop.f32.mrf.mxu0
        %416 = vdwg.mxu0
        %v417 = vtanh.pop %v339
        %v418 = vtanh.pop %v344
        %v419 = vtanh.pop %v349
        %v420 = vtanh.pop %v354
        %v421 = vtanh.pop %v359
        %v422 = vtanh.pop %v364
        %v423 = vtanh.pop %v369
        %v424 = vtanh.pop %v374
        %v425 = vtanh.pop %v379
        %v426 = vtanh.pop %v384
        %v427 = vtanh.pop %v389
        %v428 = vtanh.pop %v394
        %v429 = vtanh.pop %v399
        %v430 = vtanh.pop %v404
        %v431 = vtanh.pop %v409
        %v432 = vtanh.pop %v414
        %v433 = vld [vmem:[%s3] sm:$0x1]
        %v435 = vlaneseq
        %v436 = vshrl.u32 %v435, 7
        %v437 = vsub.s32 0, %v436
        %v438 = vrot.slane %v433, %v437
        %v440 = vmul.f32 %v417, %v438
        %v441 = vmul.f32 %v418, %v438
        %v442 = vmul.f32 %v419, %v438
        %v443 = vmul.f32 %v420, %v438
        %v444 = vmul.f32 %v421, %v438
        %v445 = vmul.f32 %v422, %v438
        %v446 = vmul.f32 %v423, %v438
        %v447 = vmul.f32 %v424, %v438
        %v448 = vmul.f32 %v425, %v438
        %v449 = vmul.f32 %v426, %v438
        %v450 = vmul.f32 %v427, %v438
        %v451 = vmul.f32 %v428, %v438
        %v452 = vmul.f32 %v429, %v438
        %v453 = vmul.f32 %v430, %v438
        %v454 = vmul.f32 %v431, %v438
        %v455 = vmul.f32 %v432, %v438
        %456 = vadd.xlane.f32.xlu0 %v440
        %v457 = vpop.xlane.xlu0 %456
        %458 = vadd.xlane.f32.xlu0 %v441
        %v459 = vpop.xlane.xlu0 %458
        %460 = vadd.xlane.f32.xlu0 %v442
        %v461 = vpop.xlane.xlu0 %460
        %462 = vadd.xlane.f32.xlu0 %v443
        %v463 = vpop.xlane.xlu0 %462
        %464 = vadd.xlane.f32.xlu0 %v444
        %v465 = vpop.xlane.xlu0 %464
        %466 = vadd.xlane.f32.xlu0 %v445
        %v467 = vpop.xlane.xlu0 %466
        %468 = vadd.xlane.f32.xlu0 %v446
        %v469 = vpop.xlane.xlu0 %468
        %470 = vadd.xlane.f32.xlu0 %v447
        %v471 = vpop.xlane.xlu0 %470
        %472 = vadd.xlane.f32.xlu0 %v448
        %v473 = vpop.xlane.xlu0 %472
        %474 = vadd.xlane.f32.xlu0 %v449
        %v475 = vpop.xlane.xlu0 %474
        %476 = vadd.xlane.f32.xlu0 %v450
        %v477 = vpop.xlane.xlu0 %476
        %478 = vadd.xlane.f32.xlu0 %v451
        %v479 = vpop.xlane.xlu0 %478
        %480 = vadd.xlane.f32.xlu0 %v452
        %v481 = vpop.xlane.xlu0 %480
        %482 = vadd.xlane.f32.xlu0 %v453
        %v483 = vpop.xlane.xlu0 %482
        %484 = vadd.xlane.f32.xlu0 %v454
        %v485 = vpop.xlane.xlu0 %484
        %486 = vadd.xlane.f32.xlu0 %v455
        %v487 = vpop.xlane.xlu0 %486
        %v488 = vrot.slane %v457, 4
        %v489 = vmax.f32 %v457, %v488
        %v490 = vrot.slane %v489, 2
        %v491 = vmax.f32 %v489, %v490
        %v492 = vrot.slane %v491, 1
        %v493 = vmax.f32 %v491, %v492
        %v494 = vrot.slane %v459, 4
        %v495 = vmax.f32 %v459, %v494
        %v496 = vrot.slane %v495, 2
        %v497 = vmax.f32 %v495, %v496
        %v498 = vrot.slane %v497, 1
        %v499 = vmax.f32 %v497, %v498
        %v500 = vrot.slane %v461, 4
        %v501 = vmax.f32 %v461, %v500
        %v502 = vrot.slane %v501, 2
        %v503 = vmax.f32 %v501, %v502
        %v504 = vrot.slane %v503, 1
        %v505 = vmax.f32 %v503, %v504
        %v506 = vrot.slane %v463, 4
        %v507 = vmax.f32 %v463, %v506
        %v508 = vrot.slane %v507, 2
        %v509 = vmax.f32 %v507, %v508
        %v510 = vrot.slane %v509, 1
        %v511 = vmax.f32 %v509, %v510
        %v512 = vrot.slane %v465, 4
        %v513 = vmax.f32 %v465, %v512
        %v514 = vrot.slane %v513, 2
        %v515 = vmax.f32 %v513, %v514
        %v516 = vrot.slane %v515, 1
        %v517 = vmax.f32 %v515, %v516
        %v518 = vrot.slane %v467, 4
        %v519 = vmax.f32 %v467, %v518
        %v520 = vrot.slane %v519, 2
        %v521 = vmax.f32 %v519, %v520
        %v522 = vrot.slane %v521, 1
        %v523 = vmax.f32 %v521, %v522
        %v524 = vrot.slane %v469, 4
        %v525 = vmax.f32 %v469, %v524
        %v526 = vrot.slane %v525, 2
        %v527 = vmax.f32 %v525, %v526
        %v528 = vrot.slane %v527, 1
        %v529 = vmax.f32 %v527, %v528
        %v530 = vrot.slane %v471, 4
        %v531 = vmax.f32 %v471, %v530
        %v532 = vrot.slane %v531, 2
        %v533 = vmax.f32 %v531, %v532
        %v534 = vrot.slane %v533, 1
        %v535 = vmax.f32 %v533, %v534
        %v536 = vrot.slane %v473, 4
        %v537 = vmax.f32 %v473, %v536
        %v538 = vrot.slane %v537, 2
        %v539 = vmax.f32 %v537, %v538
        %v540 = vrot.slane %v539, 1
        %v541 = vmax.f32 %v539, %v540
        %v542 = vrot.slane %v475, 4
        %v543 = vmax.f32 %v475, %v542
        %v544 = vrot.slane %v543, 2
        %v545 = vmax.f32 %v543, %v544
        %v546 = vrot.slane %v545, 1
        %v547 = vmax.f32 %v545, %v546
        %v548 = vrot.slane %v477, 4
        %v549 = vmax.f32 %v477, %v548
        %v550 = vrot.slane %v549, 2
        %v551 = vmax.f32 %v549, %v550
        %v552 = vrot.slane %v551, 1
        %v553 = vmax.f32 %v551, %v552
        %v554 = vrot.slane %v479, 4
        %v555 = vmax.f32 %v479, %v554
        %v556 = vrot.slane %v555, 2
        %v557 = vmax.f32 %v555, %v556
        %v558 = vrot.slane %v557, 1
        %v559 = vmax.f32 %v557, %v558
        %v560 = vrot.slane %v481, 4
        %v561 = vmax.f32 %v481, %v560
        %v562 = vrot.slane %v561, 2
        %v563 = vmax.f32 %v561, %v562
        %v564 = vrot.slane %v563, 1
        %v565 = vmax.f32 %v563, %v564
        %v566 = vrot.slane %v483, 4
        %v567 = vmax.f32 %v483, %v566
        %v568 = vrot.slane %v567, 2
        %v569 = vmax.f32 %v567, %v568
        %v570 = vrot.slane %v569, 1
        %v571 = vmax.f32 %v569, %v570
        %v572 = vrot.slane %v485, 4
        %v573 = vmax.f32 %v485, %v572
        %v574 = vrot.slane %v573, 2
        %v575 = vmax.f32 %v573, %v574
        %v576 = vrot.slane %v575, 1
        %v577 = vmax.f32 %v575, %v576
        %v578 = vrot.slane %v487, 4
        %v579 = vmax.f32 %v487, %v578
        %v580 = vrot.slane %v579, 2
        %v581 = vmax.f32 %v579, %v580
        %v582 = vrot.slane %v581, 1
        %v583 = vmax.f32 %v581, %v582
        %v584 = vsub.f32 %v457, %v493
        %v585 = vsub.f32 %v459, %v499
        %v586 = vsub.f32 %v461, %v505
        %v587 = vsub.f32 %v463, %v511
        %v588 = vsub.f32 %v465, %v517
        %v589 = vsub.f32 %v467, %v523
        %v590 = vsub.f32 %v469, %v529
        %v591 = vsub.f32 %v471, %v535
        %v592 = vsub.f32 %v473, %v541
        %v593 = vsub.f32 %v475, %v547
        %v594 = vsub.f32 %v477, %v553
        %v595 = vsub.f32 %v479, %v559
        %v596 = vsub.f32 %v481, %v565
        %v597 = vsub.f32 %v483, %v571
        %v598 = vsub.f32 %v485, %v577
        %v599 = vsub.f32 %v487, %v583
        %v600 = vmul.f32 %v584, 1.442695
        %v601 = vpow.pop %v600
        %v602 = vmul.f32 %v585, 1.442695
        %v603 = vpow.pop %v602
        %v604 = vmul.f32 %v586, 1.442695
        %v605 = vpow.pop %v604
        %v606 = vmul.f32 %v587, 1.442695
        %v607 = vpow.pop %v606
        %v608 = vmul.f32 %v588, 1.442695
        %v609 = vpow.pop %v608
        %v610 = vmul.f32 %v589, 1.442695
        %v611 = vpow.pop %v610
        %v612 = vmul.f32 %v590, 1.442695
        %v613 = vpow.pop %v612
        %v614 = vmul.f32 %v591, 1.442695
        %v615 = vpow.pop %v614
        %v616 = vmul.f32 %v592, 1.442695
        %v617 = vpow.pop %v616
        %v618 = vmul.f32 %v593, 1.442695
        %v619 = vpow.pop %v618
        %v620 = vmul.f32 %v594, 1.442695
        %v621 = vpow.pop %v620
        %v622 = vmul.f32 %v595, 1.442695
        %v623 = vpow.pop %v622
        %v624 = vmul.f32 %v596, 1.442695
        %v625 = vpow.pop %v624
        %v626 = vmul.f32 %v597, 1.442695
        %v627 = vpow.pop %v626
        %v628 = vmul.f32 %v598, 1.442695
        %v629 = vpow.pop %v628
        %v630 = vmul.f32 %v599, 1.442695
        %v631 = vpow.pop %v630
        %v632 = vmul.f32 %v601, %v233
        %v633 = vmul.f32 %v603, %v234
        %v634 = vmul.f32 %v605, %v235
        %v635 = vmul.f32 %v607, %v236
        %v636 = vmul.f32 %v609, %v237
        %v637 = vmul.f32 %v611, %v238
        %v638 = vmul.f32 %v613, %v239
        %v639 = vmul.f32 %v615, %v240
        %v640 = vmul.f32 %v617, %v241
        %v641 = vmul.f32 %v619, %v242
        %v642 = vmul.f32 %v621, %v243
        %v643 = vmul.f32 %v623, %v244
        %v644 = vmul.f32 %v625, %v245
        %v645 = vmul.f32 %v627, %v246
        %v646 = vmul.f32 %v629, %v247
        %v647 = vmul.f32 %v631, %v248
        %v648 = vrot.slane %v632, 4
        %v649 = vadd.f32 %v632, %v648
        %v650 = vrot.slane %v649, 2
        %v651 = vadd.f32 %v649, %v650
        %v652 = vrot.slane %v651, 1
        %v653 = vadd.f32 %v651, %v652
        %v654 = vrot.slane %v633, 4
        %v655 = vadd.f32 %v633, %v654
        %v656 = vrot.slane %v655, 2
        %v657 = vadd.f32 %v655, %v656
        %v658 = vrot.slane %v657, 1
        %v659 = vadd.f32 %v657, %v658
        %v660 = vrot.slane %v634, 4
        %v661 = vadd.f32 %v634, %v660
        %v662 = vrot.slane %v661, 2
        %v663 = vadd.f32 %v661, %v662
        %v664 = vrot.slane %v663, 1
        %v665 = vadd.f32 %v663, %v664
        %v666 = vrot.slane %v635, 4
        %v667 = vadd.f32 %v635, %v666
        %v668 = vrot.slane %v667, 2
        %v669 = vadd.f32 %v667, %v668
        %v670 = vrot.slane %v669, 1
        %v671 = vadd.f32 %v669, %v670
        %v672 = vrot.slane %v636, 4
        %v673 = vadd.f32 %v636, %v672
        %v674 = vrot.slane %v673, 2
        %v675 = vadd.f32 %v673, %v674
        %v676 = vrot.slane %v675, 1
        %v677 = vadd.f32 %v675, %v676
        %v678 = vrot.slane %v637, 4
        %v679 = vadd.f32 %v637, %v678
        %v680 = vrot.slane %v679, 2
        %v681 = vadd.f32 %v679, %v680
        %v682 = vrot.slane %v681, 1
        %v683 = vadd.f32 %v681, %v682
        %v684 = vrot.slane %v638, 4
        %v685 = vadd.f32 %v638, %v684
        %v686 = vrot.slane %v685, 2
        %v687 = vadd.f32 %v685, %v686
        %v688 = vrot.slane %v687, 1
        %v689 = vadd.f32 %v687, %v688
        %v690 = vrot.slane %v639, 4
        %v691 = vadd.f32 %v639, %v690
        %v692 = vrot.slane %v691, 2
        %v693 = vadd.f32 %v691, %v692
        %v694 = vrot.slane %v693, 1
        %v695 = vadd.f32 %v693, %v694
        %v696 = vrot.slane %v640, 4
        %v697 = vadd.f32 %v640, %v696
        %v698 = vrot.slane %v697, 2
        %v699 = vadd.f32 %v697, %v698
        %v700 = vrot.slane %v699, 1
        %v701 = vadd.f32 %v699, %v700
        %v702 = vrot.slane %v641, 4
        %v703 = vadd.f32 %v641, %v702
        %v704 = vrot.slane %v703, 2
        %v705 = vadd.f32 %v703, %v704
        %v706 = vrot.slane %v705, 1
        %v707 = vadd.f32 %v705, %v706
        %v708 = vrot.slane %v642, 4
        %v709 = vadd.f32 %v642, %v708
        %v710 = vrot.slane %v709, 2
        %v711 = vadd.f32 %v709, %v710
        %v712 = vrot.slane %v711, 1
        %v713 = vadd.f32 %v711, %v712
        %v714 = vrot.slane %v643, 4
        %v715 = vadd.f32 %v643, %v714
        %v716 = vrot.slane %v715, 2
        %v717 = vadd.f32 %v715, %v716
        %v718 = vrot.slane %v717, 1
        %v719 = vadd.f32 %v717, %v718
        %v720 = vrot.slane %v644, 4
        %v721 = vadd.f32 %v644, %v720
        %v722 = vrot.slane %v721, 2
        %v723 = vadd.f32 %v721, %v722
        %v724 = vrot.slane %v723, 1
        %v725 = vadd.f32 %v723, %v724
        %v726 = vrot.slane %v645, 4
        %v727 = vadd.f32 %v645, %v726
        %v728 = vrot.slane %v727, 2
        %v729 = vadd.f32 %v727, %v728
        %v730 = vrot.slane %v729, 1
        %v731 = vadd.f32 %v729, %v730
        %v732 = vrot.slane %v646, 4
        %v733 = vadd.f32 %v646, %v732
        %v734 = vrot.slane %v733, 2
        %v735 = vadd.f32 %v733, %v734
        %v736 = vrot.slane %v735, 1
        %v737 = vadd.f32 %v735, %v736
        %v738 = vrot.slane %v647, 4
        %v739 = vadd.f32 %v647, %v738
        %v740 = vrot.slane %v739, 2
        %v741 = vadd.f32 %v739, %v740
        %v742 = vrot.slane %v741, 1
        %v743 = vadd.f32 %v741, %v742
        %v744 = vrot.slane %v601, 4
        %v745 = vadd.f32 %v601, %v744
        %v746 = vrot.slane %v745, 2
        %v747 = vadd.f32 %v745, %v746
        %v748 = vrot.slane %v747, 1
        %v749 = vadd.f32 %v747, %v748
        %v750 = vrot.slane %v603, 4
        %v751 = vadd.f32 %v603, %v750
        %v752 = vrot.slane %v751, 2
        %v753 = vadd.f32 %v751, %v752
        %v754 = vrot.slane %v753, 1
        %v755 = vadd.f32 %v753, %v754
        %v756 = vrot.slane %v605, 4
        %v757 = vadd.f32 %v605, %v756
        %v758 = vrot.slane %v757, 2
        %v759 = vadd.f32 %v757, %v758
        %v760 = vrot.slane %v759, 1
        %v761 = vadd.f32 %v759, %v760
        %v762 = vrot.slane %v607, 4
        %v763 = vadd.f32 %v607, %v762
        %v764 = vrot.slane %v763, 2
        %v765 = vadd.f32 %v763, %v764
        %v766 = vrot.slane %v765, 1
        %v767 = vadd.f32 %v765, %v766
        %v768 = vrot.slane %v609, 4
        %v769 = vadd.f32 %v609, %v768
        %v770 = vrot.slane %v769, 2
        %v771 = vadd.f32 %v769, %v770
        %v772 = vrot.slane %v771, 1
        %v773 = vadd.f32 %v771, %v772
        %v774 = vrot.slane %v611, 4
        %v775 = vadd.f32 %v611, %v774
        %v776 = vrot.slane %v775, 2
        %v777 = vadd.f32 %v775, %v776
        %v778 = vrot.slane %v777, 1
        %v779 = vadd.f32 %v777, %v778
        %v780 = vrot.slane %v613, 4
        %v781 = vadd.f32 %v613, %v780
        %v782 = vrot.slane %v781, 2
        %v783 = vadd.f32 %v781, %v782
        %v784 = vrot.slane %v783, 1
        %v785 = vadd.f32 %v783, %v784
        %v786 = vrot.slane %v615, 4
        %v787 = vadd.f32 %v615, %v786
        %v788 = vrot.slane %v787, 2
        %v789 = vadd.f32 %v787, %v788
        %v790 = vrot.slane %v789, 1
        %v791 = vadd.f32 %v789, %v790
        %v792 = vrot.slane %v617, 4
        %v793 = vadd.f32 %v617, %v792
        %v794 = vrot.slane %v793, 2
        %v795 = vadd.f32 %v793, %v794
        %v796 = vrot.slane %v795, 1
        %v797 = vadd.f32 %v795, %v796
        %v798 = vrot.slane %v619, 4
        %v799 = vadd.f32 %v619, %v798
        %v800 = vrot.slane %v799, 2
        %v801 = vadd.f32 %v799, %v800
        %v802 = vrot.slane %v801, 1
        %v803 = vadd.f32 %v801, %v802
        %v804 = vrot.slane %v621, 4
        %v805 = vadd.f32 %v621, %v804
        %v806 = vrot.slane %v805, 2
        %v807 = vadd.f32 %v805, %v806
        %v808 = vrot.slane %v807, 1
        %v809 = vadd.f32 %v807, %v808
        %v810 = vrot.slane %v623, 4
        %v811 = vadd.f32 %v623, %v810
        %v812 = vrot.slane %v811, 2
        %v813 = vadd.f32 %v811, %v812
        %v814 = vrot.slane %v813, 1
        %v815 = vadd.f32 %v813, %v814
        %v816 = vrot.slane %v625, 4
        %v817 = vadd.f32 %v625, %v816
        %v818 = vrot.slane %v817, 2
        %v819 = vadd.f32 %v817, %v818
        %v820 = vrot.slane %v819, 1
        %v821 = vadd.f32 %v819, %v820
        %v822 = vrot.slane %v627, 4
        %v823 = vadd.f32 %v627, %v822
        %v824 = vrot.slane %v823, 2
        %v825 = vadd.f32 %v823, %v824
        %v826 = vrot.slane %v825, 1
        %v827 = vadd.f32 %v825, %v826
        %v828 = vrot.slane %v629, 4
        %v829 = vadd.f32 %v629, %v828
        %v830 = vrot.slane %v829, 2
        %v831 = vadd.f32 %v829, %v830
        %v832 = vrot.slane %v831, 1
        %v833 = vadd.f32 %v831, %v832
        %v834 = vrot.slane %v631, 4
        %v835 = vadd.f32 %v631, %v834
        %v836 = vrot.slane %v835, 2
        %v837 = vadd.f32 %v835, %v836
        %v838 = vrot.slane %v837, 1
        %v839 = vadd.f32 %v837, %v838
        %v840 = vrcp.pop %v749
        %v841 = vrcp.pop %v755
        %v842 = vrcp.pop %v761
        %v843 = vrcp.pop %v767
        %v844 = vrcp.pop %v773
        %v845 = vrcp.pop %v779
        %v846 = vrcp.pop %v785
        %v847 = vrcp.pop %v791
        %v848 = vrcp.pop %v797
        %v849 = vrcp.pop %v803
        %v850 = vrcp.pop %v809
        %v851 = vrcp.pop %v815
        %v852 = vrcp.pop %v821
        %v853 = vrcp.pop %v827
        %v854 = vrcp.pop %v833
        %v855 = vrcp.pop %v839
        %v856 = vmul.f32 %v653, %v840
        %v857 = vmul.f32 %v659, %v841
        %v858 = vmul.f32 %v665, %v842
        %v859 = vmul.f32 %v671, %v843
        %v860 = vmul.f32 %v677, %v844
        %v861 = vmul.f32 %v683, %v845
        %v862 = vmul.f32 %v689, %v846
        %v863 = vmul.f32 %v695, %v847
        %v864 = vmul.f32 %v701, %v848
        %v865 = vmul.f32 %v707, %v849
        %v866 = vmul.f32 %v713, %v850
        %v867 = vmul.f32 %v719, %v851
        %v868 = vmul.f32 %v725, %v852
        %v869 = vmul.f32 %v731, %v853
        %v870 = vmul.f32 %v737, %v854
        %v871 = vmul.f32 %v743, %v855
        %vm888 = vcmask 1041409
        %v889 = vsel %vm888, %v857, %v856
        %vm890 = vcmask 1042434
        %v891 = vsel %vm890, %v858, %v889
        %vm892 = vcmask 1043459
        %v893 = vsel %vm892, %v859, %v891
        %vm894 = vcmask 1044484
        %v895 = vsel %vm894, %v860, %v893
        %vm896 = vcmask 1045509
        %v897 = vsel %vm896, %v861, %v895
        %vm898 = vcmask 1046534
        %v899 = vsel %vm898, %v862, %v897
        %vm900 = vcmask 1047559
        %v901 = vsel %vm900, %v863, %v899
        %v902 = vsel %vm888, %v865, %v864
        %v903 = vsel %vm890, %v866, %v902
        %v904 = vsel %vm892, %v867, %v903
        %v905 = vsel %vm894, %v868, %v904
        %v906 = vsel %vm896, %v869, %v905
        %v907 = vsel %vm898, %v870, %v906
        %v908 = vsel %vm900, %v871, %v907
        %911 = vst [vmem:[%s230] sm:$0xff] %v901
        %912 = vst [vmem:[%s230 + $0x8] sm:$0xff] %v908
        %s913 = sand.u32 %s119, 1
        %s914 = scalar_lea.sflag [#allocation4], %s913
        %s915 = sand.u32 %s119, 1
        %s916 = smul.addr %s915, 16
        %s917 = scalar_lea.vmem [#allocation7], %s916
        // Predicated region
        $region45: #{tpu_custom_call.1} parent=35 // pred_check
          %p918 = pneg %p129
        $region46: #{tpu_custom_call.1} parent=35 // pred_check_branch
          %920 = sbr.rel (%p918) target = $region48
        $region47: #{tpu_custom_call.1} parent=35 // pred_region
          %s921 = smul.u32 2, %s22
          %s923 = ssub.s32 256, 256
          %924 = vsyncadd %s914, %s923
          %s925 = smul.addr %s921, 128
          %s926 = scalar_lea.hbm %s4, %s925
          %s927 = sshll.u32 %s917, 4
          %s928 = int_to_ptr.vmem [resolvable:$true] %s927
          %933 = dma.vmem_to_hbm [thread:$0]  %s928, 256, %s926, %s914, 128, 128, 8
        $region48: #{tpu_custom_call.1} parent=35 // pred_fallthru
          _
      $region36: #{tpu_custom_call.1} parent=5 // pred_fallthru
        _
      %p934 = scmp.le.s32.totalorder 2, %s17
      // Predicated region
      $region49: #{tpu_custom_call.1} parent=5 // pred_check
        %p935 = pneg %p934
      $region50: #{tpu_custom_call.1} parent=5 // pred_check_branch
        %937 = sbr.rel (%p935) target = $region52
      $region51: #{tpu_custom_call.1} parent=5 // pred_region
        %s938 = ssub.s32 %s17, 2
        // Predicated region
        $region53: #{tpu_custom_call.1} parent=51 // pred_check
          %p939 = pneg %p135
        $region54: #{tpu_custom_call.1} parent=51 // pred_check_branch
          %941 = sbr.rel (%p939) target = $region56
        $region55: #{tpu_custom_call.1} parent=51 // pred_region
          %s942 = sand.u32 %s120, 1
          %s943 = scalar_lea.sflag [#allocation4], %s942
          %s944 = sand.u32 %s120, 1
          %s945 = smul.addr %s944, 16
          %s946 = scalar_lea.vmem [#allocation7], %s945
          %947 = dma.done %s943, 256
        $region56: #{tpu_custom_call.1} parent=51 // pred_fallthru
          _
      $region52: #{tpu_custom_call.1} parent=5 // pred_fallthru
        _
    $region6: #{tpu_custom_call.1} parent=1 // loop_footer
      %s21 = sadd.s32 1, %s17
    $region7: #{tpu_custom_call.1} parent=1 // loop_footer_branch
      %16 = sbr.rel target = $region3
    $region8: #{tpu_custom_call.1} parent=1 // loop_exit
      _
    %948 = vsyncpa [#allocation3], 1
    %s949 = scalar_lea.sflag [#allocation3], 1
    %950 = vsyncpa %s949, 1
    %951 = vsyncpa [#allocation6], 1
    %952 = vsyncpa [#allocation4], 1
    %s953 = scalar_lea.sflag [#allocation4], 1
    %954 = vsyncpa %s953, 1

</llo_original>
